<compile_context>
chip_gen: v7x
topology: tpu7x:2x2x1
jax: 0.10.0
libtpu: 0.0.40
codegen_flags: <defaults>
</compile_context>

<pallas_src>
import functools

import jax
import jax.numpy as jnp
from jax.experimental import pallas as pl
from jax.experimental.pallas import tpu as pltpu


def _round_up(x, m):
    return (x + m - 1) // m * m


def _tc_per_chip():
    """Best-effort TensorCore-per-chip count (v7x has 2)."""
    try:
        kind = jax.devices()[0].device_kind.lower()
        if "v7" in kind or "7x" in kind:
            return 2
    except Exception:  # pragma: no cover - defensive
        pass
    return 1


def _gru_kernel(seq_len, seq_len_padded, gi_ref, h0_ref, whh_ref, bhn_ref,
                hseq_ref, hlast_ref, h_scratch):
    """One grid step == TB timesteps of one batch block.

    gi_ref   : (TB, BB, 3*Hp) bf16  precomputed input projection (+ folded biases)
    h0_ref   : (BB, Hp)       f32   initial hidden for this batch block
    whh_ref  : (Hp, 3*Hp)     bf16  W_hh^T, gate boundaries aligned to Hp
    bhn_ref  : (1, Hp)        f32   b_hn (only bias that must stay inside r*(.))
    hseq_ref : (TB, BB, Hp)   bf16  hidden state at every timestep (output)
    hlast_ref: (BB, Hp)       f32   final hidden state (output)
    h_scratch: (BB, Hp)       f32   recurrent carry across time blocks
    """
    blk_t = pl.program_id(1)
    tb, bb, _ = gi_ref.shape
    hp = h_scratch.shape[-1]

    @pl.when(blk_t == 0)
    def _():
        h_scratch[...] = h0_ref[...]

    # Hoisted out of the per-timestep loop (JAX does not CSE broadcast_in_dim).
    b_hn = jnp.broadcast_to(bhn_ref[...], (bb, hp))          # (BB, Hp) f32
    t0 = blk_t * tb

    def step(i, h):
        gi = gi_ref[i].astype(jnp.float32)                   # (BB, 3*Hp)
        # bf16 x bf16 MXU matmul, f32 accumulate (native MXU on all gens).
        # Weight is read from VMEM each step (cheap vld) instead of being held
        # live across the loop (avoids vreg spill pressure at large Hp).
        gh = jnp.dot(h.astype(jnp.bfloat16), whh_ref[...],
                     preferred_element_type=jnp.float32)
        r = jax.nn.sigmoid(gi[:, :hp] + gh[:, :hp])
        z = jax.nn.sigmoid(gi[:, hp:2 * hp] + gh[:, hp:2 * hp])
        n = jnp.tanh(gi[:, 2 * hp:] + r * (gh[:, 2 * hp:] + b_hn))
        h_new = (1.0 - z) * n + z * h
        if seq_len_padded != seq_len:                        # static check
            h_new = jnp.where(t0 + i < seq_len, h_new, h)    # freeze pad steps
        hseq_ref[i] = h_new.astype(hseq_ref.dtype)
        return h_new

    h_final = jax.lax.fori_loop(0, tb, step, h_scratch[...],
                                unroll=min(tb, 8))
    h_scratch[...] = h_final

    @pl.when(blk_t == pl.num_programs(1) - 1)
    def _():
        hlast_ref[...] = h_final


def recurrent_network_forward(x, h0, params, *, time_block=32):
    """x: (B, T, D) float32, h0: (1, B, H) or None. Returns (y, hidden)."""
    B, T, D = x.shape
    H = params["w_hh"].shape[0] // 3
    dtype = x.dtype

    if h0 is None:
        h0 = jnp.zeros((1, B, H), dtype=dtype)

    f32, bf16 = jnp.float32, jnp.bfloat16

    # ---- Padded / aligned sizes ------------------------------------------
    Hp = _round_up(H, 128)           # lane-dense gate slices & output stores
    if _tc_per_chip() >= 2 and _round_up(B, 8) >= 16:
        Bp = _round_up(B, 32)        # split batch -> "parallel" axis extent 2
        BB = Bp // 2                 # (v7x megacore; BB stays a 16-multiple)
    else:
        Bp = _round_up(B, 16)        # bf16-tile-aligned sublane dim
        BB = Bp                      # single TC: maximize MXU M per step
    TB = min(time_block, T)          # timesteps per grid step (sweepable)
    Tp = _round_up(T, TB)

    w_ih = params["w_ih"].astype(f32)           # (3H, D)
    w_hh_t = params["w_hh"].astype(f32).T       # (H, 3H)
    b_ih = params["b_ih"].astype(f32)
    b_hh = params["b_hh"].astype(f32)

    # ---- Gate-aligned padded weights (tiny; padded lanes/rows are 0) ------
    # b_ih plus the r/z pieces of b_hh fold into the hoisted input projection;
    # only b_hn (scaled by r inside the gate) stays in the recurrent kernel.
    b_fold = b_ih + jnp.concatenate(
        [b_hh[:H], b_hh[H:2 * H], jnp.zeros((H,), f32)])
    w_ih_pad = jnp.zeros((3 * Hp, D), f32)
    b_fold_pad = jnp.zeros((3 * Hp,), f32)
    whh_pad = jnp.zeros((Hp, 3 * Hp), f32)
    for g in range(3):
        w_ih_pad = w_ih_pad.at[g * Hp:g * Hp + H].set(w_ih[g * H:(g + 1) * H])
        b_fold_pad = b_fold_pad.at[g * Hp:g * Hp + H].set(
            b_fold[g * H:(g + 1) * H])
        whh_pad = whh_pad.at[:H, g * Hp:g * Hp + H].set(
            w_hh_t[:, g * H:(g + 1) * H])
    whh_pad = whh_pad.astype(bf16)              # resident weight: bf16
    bhn_pad = jnp.zeros((1, Hp), f32).at[0, :H].set(b_hh[2 * H:])
    h0_pad = jnp.zeros((Bp, Hp), f32).at[:B, :H].set(h0[0].astype(f32))

    # ---- Hoisted input projection: one big bf16 MXU matmul, written directly
    # into the padded gate-aligned (Tp, Bp, 3*Hp) layout (no re-pad scatter). --
    x_pad = jnp.zeros((Bp, Tp, D), bf16).at[:B, :T].set(x.astype(bf16))
    gi_pad = (jnp.einsum("btd,gd->tbg", x_pad, w_ih_pad.astype(bf16),
                         preferred_element_type=f32)
              + b_fold_pad).astype(bf16)        # (Tp, Bp, 3*Hp), streamed bf16

    kernel = functools.partial(_gru_kernel, T, Tp)

    # ---- Scoped-VMEM budget sized from the actual block buffers -----------
    vmem_bytes = (
        2 * TB * BB * 3 * Hp * 2     # gi, double-buffered bf16
        + 2 * TB * BB * Hp * 2       # h_seq, double-buffered bf16
        + 1 * Hp * 3 * Hp * 2        # W_hh^T, single-buffered bf16
        + 1 * BB * Hp * 4            # h0, single-buffered f32
        + 8 * 128 * 4                # b_hn (one padded f32 tile)
        + 2 * BB * Hp * 4            # h_last, double-buffered f32
        + BB * Hp * 4                # carry scratch f32
    )
    vmem_limit = int(min(64 * 2**20, max(32 * 2**20, 2 * vmem_bytes)))

    const1 = pl.Buffered(1)          # grid-constant operands: single buffer

    h_seq_pad, h_last_pad = pl.pallas_call(
        kernel,
        out_shape=(
            jax.ShapeDtypeStruct((Tp, Bp, Hp), bf16),
            jax.ShapeDtypeStruct((Bp, Hp), f32),
        ),
        grid_spec=pltpu.PrefetchScalarGridSpec(
            num_scalar_prefetch=0,
            grid=(Bp // BB, Tp // TB),
            in_specs=[
                pl.BlockSpec((TB, BB, 3 * Hp), lambda b, t: (t, b, 0)),   # gi
                pl.BlockSpec((BB, Hp), lambda b, t: (b, 0),
                             pipeline_mode=const1),                       # h0
                pl.BlockSpec((Hp, 3 * Hp), lambda b, t: (0, 0),
                             pipeline_mode=const1),                       # W_hh^T
                pl.BlockSpec((1, Hp), lambda b, t: (0, 0),
                             pipeline_mode=const1),                       # b_hn
            ],
            out_specs=[
                pl.BlockSpec((TB, BB, Hp), lambda b, t: (t, b, 0)),       # h_seq
                pl.BlockSpec((BB, Hp), lambda b, t: (b, 0)),              # h_last
            ],
            scratch_shapes=[pltpu.VMEM((BB, Hp), jnp.float32)],
        ),
        compiler_params=pltpu.CompilerParams(
            dimension_semantics=("parallel", "arbitrary"),
            vmem_limit_bytes=vmem_limit),
    )(gi_pad, h0_pad, whh_pad, bhn_pad)

    # ---- Deferred output head: transpose folded into one bf16 MXU matmul --
    w_out_pad = jnp.zeros((params["w_out"].shape[0], Hp), bf16)
    w_out_pad = w_out_pad.at[:, :H].set(params["w_out"].astype(bf16))
    y = (jnp.einsum("tbh,oh->bto", h_seq_pad[:T, :B, :], w_out_pad,
                    preferred_element_type=f32)
         + params["b_out"].astype(f32)).astype(dtype)
    hidden = h_last_pad[:B, :H][None, :, :].astype(dtype)
    return y, hidden


def init_params(key, input_dim, hidden_dim, output_dim):
    """Deterministic parameter init matching the PyTorch module's shapes."""
    ks = jax.random.split(key, 6)
    bound = 1.0 / jnp.sqrt(hidden_dim)
    u = lambda k, shape: jax.random.uniform(k, shape, jnp.float32, -bound, bound)
    return {
        "w_ih": u(ks[0], (3 * hidden_dim, input_dim)),
        "w_hh": u(ks[1], (3 * hidden_dim, hidden_dim)),
        "b_ih": u(ks[2], (3 * hidden_dim,)),
        "b_hh": u(ks[3], (3 * hidden_dim,)),
        "w_out": u(ks[4], (output_dim, hidden_dim)),
        "b_out": u(ks[5], (output_dim,)),
    }


def _reference_forward(x, h0, params):
    """Pure-JAX f32 reference (lax.scan GRU) for correctness checking."""
    B, T, D = x.shape
    H = params["w_hh"].shape[0] // 3
    if h0 is None:
        h0 = jnp.zeros((1, B, H), dtype=x.dtype)

    def step(h, x_t):
        gi = x_t @ params["w_ih"].T + params["b_ih"]
        gh = h @ params["w_hh"].T + params["b_hh"]
        i_r, i_z, i_n = gi[:, :H], gi[:, H:2 * H], gi[:, 2 * H:]
        h_r, h_z, h_n = gh[:, :H], gh[:, H:2 * H], gh[:, 2 * H:]
        r = jax.nn.sigmoid(i_r + h_r)
        z = jax.nn.sigmoid(i_z + h_z)
        n = jnp.tanh(i_n + r * h_n)
        h_new = (1.0 - z) * n + z * h
        return h_new, h_new

    h_last, hs = jax.lax.scan(step, h0[0], jnp.transpose(x, (1, 0, 2)))
    outs = jnp.transpose(hs, (1, 0, 2))
    y = outs @ params["w_out"].T + params["b_out"]
    return y, h_last[None, :, :]


if __name__ == "__main__":
    B, T, D, H, O = 2, 8, 16, 32, 8

    key = jax.random.PRNGKey(0)
    k_x, k_p = jax.random.split(key)
    x = jax.random.normal(k_x, (B, T, D), dtype=jnp.float32)
    params = init_params(k_p, D, H, O)

    fwd = jax.jit(functools.partial(recurrent_network_forward, params=params))
    y, hidden = fwd(x, None)
    jax.block_until_ready((y, hidden))

    y_ref, h_ref = _reference_forward(x, None, params)
    assert y.shape == (B, T, O) and hidden.shape == (1, B, H)
    # bf16-appropriate bounds (matmuls / streamed state run in bf16).
    assert jnp.allclose(y, y_ref, atol=5e-2, rtol=5e-2)
    assert jnp.allclose(hidden, h_ref, atol=5e-2, rtol=5e-2)

    print("KERNEL_OK")
</pallas_src>

<mosaic_0001>
module attributes {stable_mosaic.version = 11 : i64} {
  func.func @_gru_kernel(%arg0: i32, %arg1: i32, %arg2: memref<8x16x384xbf16, #tpu.memory_space<vmem>>, %arg3: memref<16x128xf32, #tpu.memory_space<vmem>>, %arg4: memref<128x384xbf16, #tpu.memory_space<vmem>>, %arg5: memref<1x128xf32, #tpu.memory_space<vmem>>, %arg6: memref<8x16x128xbf16, #tpu.memory_space<vmem>>, %arg7: memref<16x128xf32, #tpu.memory_space<vmem>>, %arg8: memref<16x128xf32, #tpu.memory_space<vmem>>) attributes {dimension_semantics = [#tpu.dimension_semantics<parallel>, #tpu.dimension_semantics<arbitrary>], iteration_bounds = array<i64: 1, 1>, scalar_prefetch = 0 : i64, scratch_operands = 1 : i64, tpu.core_type = #tpu.core_type<tc>, window_params = [{transform_indices = @transform_0, window_bounds = array<i64: 8, 16, 384>}, {pipeline_mode = #tpu.pipeline_mode<synchronous>, transform_indices = @transform_1, window_bounds = array<i64: 16, 128>}, {pipeline_mode = #tpu.pipeline_mode<synchronous>, transform_indices = @transform_2, window_bounds = array<i64: 128, 384>}, {pipeline_mode = #tpu.pipeline_mode<synchronous>, transform_indices = @transform_3, window_bounds = array<i64: 1, 128>}, {transform_indices = @transform_4, window_bounds = array<i64: 8, 16, 128>}, {transform_indices = @transform_5, window_bounds = array<i64: 16, 128>}]} {
    %c0_i32 = arith.constant 0 : i32
    %0 = arith.cmpi eq, %arg1, %c0_i32 : i32
    %1 = arith.extui %0 : i1 to i32
    %c0_i32_0 = arith.constant 0 : i32
    %2 = arith.cmpi ne, %1, %c0_i32_0 : i32
    scf.if %2 {
      %c0_88 = arith.constant 0 : index
      %c0_89 = arith.constant 0 : index
      %323 = vector.load %arg3[%c0_88, %c0_89] : memref<16x128xf32, #tpu.memory_space<vmem>>, vector<16x128xf32>
      %c0_90 = arith.constant 0 : index
      %c0_91 = arith.constant 0 : index
      %324 = vector.load %arg8[%c0_90, %c0_91] : memref<16x128xf32, #tpu.memory_space<vmem>>, vector<16x128xf32>
      tpu.vector_store %arg8[%c0_90, %c0_91], %323 {strides = array<i32>} : memref<16x128xf32, #tpu.memory_space<vmem>>, vector<16x128xf32>,
    } else {
    }
    %c0 = arith.constant 0 : index
    %c0_1 = arith.constant 0 : index
    %3 = vector.load %arg5[%c0, %c0_1] : memref<1x128xf32, #tpu.memory_space<vmem>>, vector<1x128xf32>
    %4 = vector.shape_cast %3 : vector<1x128xf32> to vector<1x128xf32>
    %5 = vector.broadcast %4 : vector<1x128xf32> to vector<16x128xf32>
    %c0_2 = arith.constant 0 : index
    %c0_3 = arith.constant 0 : index
    %6 = vector.load %arg8[%c0_2, %c0_3] : memref<16x128xf32, #tpu.memory_space<vmem>>, vector<16x128xf32>
    %c0_i32_4 = arith.constant 0 : i32
    %7 = arith.index_cast %c0_i32_4 : i32 to index
    %c0_5 = arith.constant 0 : index
    %c0_6 = arith.constant 0 : index
    %8 = vector.load %arg2[%7, %c0_5, %c0_6] : memref<8x16x384xbf16, #tpu.memory_space<vmem>>, vector<1x16x384xbf16>
    %9 = vector.shape_cast %8 : vector<1x16x384xbf16> to vector<16x384xbf16>
    %10 = arith.extf %9 : vector<16x384xbf16> to vector<16x384xf32>
    %11 = arith.truncf %6 : vector<16x128xf32> to vector<16x128xbf16>
    %c0_7 = arith.constant 0 : index
    %c0_8 = arith.constant 0 : index
    %12 = vector.load %arg4[%c0_7, %c0_8] : memref<128x384xbf16, #tpu.memory_space<vmem>>, vector<128x384xbf16>
    %cst = arith.constant dense<0.000000e+00> : vector<16x384xf32>
    %13 = tpu.matmul %11, %12, %cst {dimension_numbers = #tpu.dot_dimension_numbers<[1], [0], [0], [1], [0, 0, 1, 1], [], []>} : vector<16x128xbf16>, vector<128x384xbf16>, vector<16x384xf32> -> vector<16x384xf32>
    %14 = vector.extract_strided_slice %10 {offsets = [0, 0], sizes = [16, 128], strides = [1, 1]} : vector<16x384xf32> to vector<16x128xf32>
    %15 = vector.extract_strided_slice %13 {offsets = [0, 0], sizes = [16, 128], strides = [1, 1]} : vector<16x384xf32> to vector<16x128xf32>
    %16 = arith.addf %14, %15 : vector<16x128xf32>
    %17 = arith.negf %16 : vector<16x128xf32>
    %18 = math.exp %17 : vector<16x128xf32>
    %cst_9 = arith.constant 1.000000e+00 : f32
    %19 = vector.broadcast %cst_9 : f32 to vector<16x128xf32>
    %20 = arith.addf %19, %18 : vector<16x128xf32>
    %21 = arith.divf %19, %20 : vector<16x128xf32>
    %22 = vector.extract_strided_slice %10 {offsets = [0, 128], sizes = [16, 128], strides = [1, 1]} : vector<16x384xf32> to vector<16x128xf32>
    %23 = vector.extract_strided_slice %13 {offsets = [0, 128], sizes = [16, 128], strides = [1, 1]} : vector<16x384xf32> to vector<16x128xf32>
    %24 = arith.addf %22, %23 : vector<16x128xf32>
    %25 = arith.negf %24 : vector<16x128xf32>
    %26 = math.exp %25 : vector<16x128xf32>
    %cst_10 = arith.constant 1.000000e+00 : f32
    %27 = vector.broadcast %cst_10 : f32 to vector<16x128xf32>
    %28 = arith.addf %27, %26 : vector<16x128xf32>
    %29 = arith.divf %27, %28 : vector<16x128xf32>
    %30 = vector.extract_strided_slice %10 {offsets = [0, 256], sizes = [16, 128], strides = [1, 1]} : vector<16x384xf32> to vector<16x128xf32>
    %31 = vector.extract_strided_slice %13 {offsets = [0, 256], sizes = [16, 128], strides = [1, 1]} : vector<16x384xf32> to vector<16x128xf32>
    %32 = arith.addf %31, %5 : vector<16x128xf32>
    %33 = arith.mulf %21, %32 : vector<16x128xf32>
    %34 = arith.addf %30, %33 : vector<16x128xf32>
    %35 = math.tanh %34 : vector<16x128xf32>
    %cst_11 = arith.constant 1.000000e+00 : f32
    %36 = vector.broadcast %cst_11 : f32 to vector<16x128xf32>
    %37 = arith.subf %36, %29 : vector<16x128xf32>
    %38 = arith.mulf %37, %35 : vector<16x128xf32>
    %39 = arith.mulf %29, %6 : vector<16x128xf32>
    %40 = arith.addf %38, %39 : vector<16x128xf32>
    %41 = arith.truncf %40 : vector<16x128xf32> to vector<16x128xbf16>
    %42 = arith.index_cast %c0_i32_4 : i32 to index
    %c0_12 = arith.constant 0 : index
    %c0_13 = arith.constant 0 : index
    %43 = vector.load %arg6[%42, %c0_12, %c0_13] : memref<8x16x128xbf16, #tpu.memory_space<vmem>>, vector<1x16x128xbf16>
    %44 = vector.shape_cast %43 : vector<1x16x128xbf16> to vector<16x128xbf16>
    %45 = vector.shape_cast %41 : vector<16x128xbf16> to vector<1x16x128xbf16>
    tpu.vector_store %arg6[%42, %c0_12, %c0_13], %45 {strides = array<i32>} : memref<8x16x128xbf16, #tpu.memory_space<vmem>>, vector<1x16x128xbf16>,
    %c1_i32 = arith.constant 1 : i32
    %46 = arith.index_cast %c1_i32 : i32 to index
    %c0_14 = arith.constant 0 : index
    %c0_15 = arith.constant 0 : index
    %47 = vector.load %arg2[%46, %c0_14, %c0_15] : memref<8x16x384xbf16, #tpu.memory_space<vmem>>, vector<1x16x384xbf16>
    %48 = vector.shape_cast %47 : vector<1x16x384xbf16> to vector<16x384xbf16>
    %49 = arith.extf %48 : vector<16x384xbf16> to vector<16x384xf32>
    %50 = arith.truncf %40 : vector<16x128xf32> to vector<16x128xbf16>
    %c0_16 = arith.constant 0 : index
    %c0_17 = arith.constant 0 : index
    %51 = vector.load %arg4[%c0_16, %c0_17] : memref<128x384xbf16, #tpu.memory_space<vmem>>, vector<128x384xbf16>
    %cst_18 = arith.constant dense<0.000000e+00> : vector<16x384xf32>
    %52 = tpu.matmul %50, %51, %cst_18 {dimension_numbers = #tpu.dot_dimension_numbers<[1], [0], [0], [1], [0, 0, 1, 1], [], []>} : vector<16x128xbf16>, vector<128x384xbf16>, vector<16x384xf32> -> vector<16x384xf32>
    %53 = vector.extract_strided_slice %49 {offsets = [0, 0], sizes = [16, 128], strides = [1, 1]} : vector<16x384xf32> to vector<16x128xf32>
    %54 = vector.extract_strided_slice %52 {offsets = [0, 0], sizes = [16, 128], strides = [1, 1]} : vector<16x384xf32> to vector<16x128xf32>
    %55 = arith.addf %53, %54 : vector<16x128xf32>
    %56 = arith.negf %55 : vector<16x128xf32>
    %57 = math.exp %56 : vector<16x128xf32>
    %cst_19 = arith.constant 1.000000e+00 : f32
    %58 = vector.broadcast %cst_19 : f32 to vector<16x128xf32>
    %59 = arith.addf %58, %57 : vector<16x128xf32>
    %60 = arith.divf %58, %59 : vector<16x128xf32>
    %61 = vector.extract_strided_slice %49 {offsets = [0, 128], sizes = [16, 128], strides = [1, 1]} : vector<16x384xf32> to vector<16x128xf32>
    %62 = vector.extract_strided_slice %52 {offsets = [0, 128], sizes = [16, 128], strides = [1, 1]} : vector<16x384xf32> to vector<16x128xf32>
    %63 = arith.addf %61, %62 : vector<16x128xf32>
    %64 = arith.negf %63 : vector<16x128xf32>
    %65 = math.exp %64 : vector<16x128xf32>
    %cst_20 = arith.constant 1.000000e+00 : f32
    %66 = vector.broadcast %cst_20 : f32 to vector<16x128xf32>
    %67 = arith.addf %66, %65 : vector<16x128xf32>
    %68 = arith.divf %66, %67 : vector<16x128xf32>
    %69 = vector.extract_strided_slice %49 {offsets = [0, 256], sizes = [16, 128], strides = [1, 1]} : vector<16x384xf32> to vector<16x128xf32>
    %70 = vector.extract_strided_slice %52 {offsets = [0, 256], sizes = [16, 128], strides = [1, 1]} : vector<16x384xf32> to vector<16x128xf32>
    %71 = arith.addf %70, %5 : vector<16x128xf32>
    %72 = arith.mulf %60, %71 : vector<16x128xf32>
    %73 = arith.addf %69, %72 : vector<16x128xf32>
    %74 = math.tanh %73 : vector<16x128xf32>
    %cst_21 = arith.constant 1.000000e+00 : f32
    %75 = vector.broadcast %cst_21 : f32 to vector<16x128xf32>
    %76 = arith.subf %75, %68 : vector<16x128xf32>
    %77 = arith.mulf %76, %74 : vector<16x128xf32>
    %78 = arith.mulf %68, %40 : vector<16x128xf32>
    %79 = arith.addf %77, %78 : vector<16x128xf32>
    %80 = arith.truncf %79 : vector<16x128xf32> to vector<16x128xbf16>
    %81 = arith.index_cast %c1_i32 : i32 to index
    %c0_22 = arith.constant 0 : index
    %c0_23 = arith.constant 0 : index
    %82 = vector.load %arg6[%81, %c0_22, %c0_23] : memref<8x16x128xbf16, #tpu.memory_space<vmem>>, vector<1x16x128xbf16>
    %83 = vector.shape_cast %82 : vector<1x16x128xbf16> to vector<16x128xbf16>
    %84 = vector.shape_cast %80 : vector<16x128xbf16> to vector<1x16x128xbf16>
    tpu.vector_store %arg6[%81, %c0_22, %c0_23], %84 {strides = array<i32>} : memref<8x16x128xbf16, #tpu.memory_space<vmem>>, vector<1x16x128xbf16>,
    %c2_i32 = arith.constant 2 : i32
    %85 = arith.index_cast %c2_i32 : i32 to index
    %c0_24 = arith.constant 0 : index
    %c0_25 = arith.constant 0 : index
    %86 = vector.load %arg2[%85, %c0_24, %c0_25] : memref<8x16x384xbf16, #tpu.memory_space<vmem>>, vector<1x16x384xbf16>
    %87 = vector.shape_cast %86 : vector<1x16x384xbf16> to vector<16x384xbf16>
    %88 = arith.extf %87 : vector<16x384xbf16> to vector<16x384xf32>
    %89 = arith.truncf %79 : vector<16x128xf32> to vector<16x128xbf16>
    %c0_26 = arith.constant 0 : index
    %c0_27 = arith.constant 0 : index
    %90 = vector.load %arg4[%c0_26, %c0_27] : memref<128x384xbf16, #tpu.memory_space<vmem>>, vector<128x384xbf16>
    %cst_28 = arith.constant dense<0.000000e+00> : vector<16x384xf32>
    %91 = tpu.matmul %89, %90, %cst_28 {dimension_numbers = #tpu.dot_dimension_numbers<[1], [0], [0], [1], [0, 0, 1, 1], [], []>} : vector<16x128xbf16>, vector<128x384xbf16>, vector<16x384xf32> -> vector<16x384xf32>
    %92 = vector.extract_strided_slice %88 {offsets = [0, 0], sizes = [16, 128], strides = [1, 1]} : vector<16x384xf32> to vector<16x128xf32>
    %93 = vector.extract_strided_slice %91 {offsets = [0, 0], sizes = [16, 128], strides = [1, 1]} : vector<16x384xf32> to vector<16x128xf32>
    %94 = arith.addf %92, %93 : vector<16x128xf32>
    %95 = arith.negf %94 : vector<16x128xf32>
    %96 = math.exp %95 : vector<16x128xf32>
    %cst_29 = arith.constant 1.000000e+00 : f32
    %97 = vector.broadcast %cst_29 : f32 to vector<16x128xf32>
    %98 = arith.addf %97, %96 : vector<16x128xf32>
    %99 = arith.divf %97, %98 : vector<16x128xf32>
    %100 = vector.extract_strided_slice %88 {offsets = [0, 128], sizes = [16, 128], strides = [1, 1]} : vector<16x384xf32> to vector<16x128xf32>
    %101 = vector.extract_strided_slice %91 {offsets = [0, 128], sizes = [16, 128], strides = [1, 1]} : vector<16x384xf32> to vector<16x128xf32>
    %102 = arith.addf %100, %101 : vector<16x128xf32>
    %103 = arith.negf %102 : vector<16x128xf32>
    %104 = math.exp %103 : vector<16x128xf32>
    %cst_30 = arith.constant 1.000000e+00 : f32
    %105 = vector.broadcast %cst_30 : f32 to vector<16x128xf32>
    %106 = arith.addf %105, %104 : vector<16x128xf32>
    %107 = arith.divf %105, %106 : vector<16x128xf32>
    %108 = vector.extract_strided_slice %88 {offsets = [0, 256], sizes = [16, 128], strides = [1, 1]} : vector<16x384xf32> to vector<16x128xf32>
    %109 = vector.extract_strided_slice %91 {offsets = [0, 256], sizes = [16, 128], strides = [1, 1]} : vector<16x384xf32> to vector<16x128xf32>
    %110 = arith.addf %109, %5 : vector<16x128xf32>
    %111 = arith.mulf %99, %110 : vector<16x128xf32>
    %112 = arith.addf %108, %111 : vector<16x128xf32>
    %113 = math.tanh %112 : vector<16x128xf32>
    %cst_31 = arith.constant 1.000000e+00 : f32
    %114 = vector.broadcast %cst_31 : f32 to vector<16x128xf32>
    %115 = arith.subf %114, %107 : vector<16x128xf32>
    %116 = arith.mulf %115, %113 : vector<16x128xf32>
    %117 = arith.mulf %107, %79 : vector<16x128xf32>
    %118 = arith.addf %116, %117 : vector<16x128xf32>
    %119 = arith.truncf %118 : vector<16x128xf32> to vector<16x128xbf16>
    %120 = arith.index_cast %c2_i32 : i32 to index
    %c0_32 = arith.constant 0 : index
    %c0_33 = arith.constant 0 : index
    %121 = vector.load %arg6[%120, %c0_32, %c0_33] : memref<8x16x128xbf16, #tpu.memory_space<vmem>>, vector<1x16x128xbf16>
    %122 = vector.shape_cast %121 : vector<1x16x128xbf16> to vector<16x128xbf16>
    %123 = vector.shape_cast %119 : vector<16x128xbf16> to vector<1x16x128xbf16>
    tpu.vector_store %arg6[%120, %c0_32, %c0_33], %123 {strides = array<i32>} : memref<8x16x128xbf16, #tpu.memory_space<vmem>>, vector<1x16x128xbf16>,
    %c3_i32 = arith.constant 3 : i32
    %124 = arith.index_cast %c3_i32 : i32 to index
    %c0_34 = arith.constant 0 : index
    %c0_35 = arith.constant 0 : index
    %125 = vector.load %arg2[%124, %c0_34, %c0_35] : memref<8x16x384xbf16, #tpu.memory_space<vmem>>, vector<1x16x384xbf16>
    %126 = vector.shape_cast %125 : vector<1x16x384xbf16> to vector<16x384xbf16>
    %127 = arith.extf %126 : vector<16x384xbf16> to vector<16x384xf32>
    %128 = arith.truncf %118 : vector<16x128xf32> to vector<16x128xbf16>
    %c0_36 = arith.constant 0 : index
    %c0_37 = arith.constant 0 : index
    %129 = vector.load %arg4[%c0_36, %c0_37] : memref<128x384xbf16, #tpu.memory_space<vmem>>, vector<128x384xbf16>
    %cst_38 = arith.constant dense<0.000000e+00> : vector<16x384xf32>
    %130 = tpu.matmul %128, %129, %cst_38 {dimension_numbers = #tpu.dot_dimension_numbers<[1], [0], [0], [1], [0, 0, 1, 1], [], []>} : vector<16x128xbf16>, vector<128x384xbf16>, vector<16x384xf32> -> vector<16x384xf32>
    %131 = vector.extract_strided_slice %127 {offsets = [0, 0], sizes = [16, 128], strides = [1, 1]} : vector<16x384xf32> to vector<16x128xf32>
    %132 = vector.extract_strided_slice %130 {offsets = [0, 0], sizes = [16, 128], strides = [1, 1]} : vector<16x384xf32> to vector<16x128xf32>
    %133 = arith.addf %131, %132 : vector<16x128xf32>
    %134 = arith.negf %133 : vector<16x128xf32>
    %135 = math.exp %134 : vector<16x128xf32>
    %cst_39 = arith.constant 1.000000e+00 : f32
    %136 = vector.broadcast %cst_39 : f32 to vector<16x128xf32>
    %137 = arith.addf %136, %135 : vector<16x128xf32>
    %138 = arith.divf %136, %137 : vector<16x128xf32>
    %139 = vector.extract_strided_slice %127 {offsets = [0, 128], sizes = [16, 128], strides = [1, 1]} : vector<16x384xf32> to vector<16x128xf32>
    %140 = vector.extract_strided_slice %130 {offsets = [0, 128], sizes = [16, 128], strides = [1, 1]} : vector<16x384xf32> to vector<16x128xf32>
    %141 = arith.addf %139, %140 : vector<16x128xf32>
    %142 = arith.negf %141 : vector<16x128xf32>
    %143 = math.exp %142 : vector<16x128xf32>
    %cst_40 = arith.constant 1.000000e+00 : f32
    %144 = vector.broadcast %cst_40 : f32 to vector<16x128xf32>
    %145 = arith.addf %144, %143 : vector<16x128xf32>
    %146 = arith.divf %144, %145 : vector<16x128xf32>
    %147 = vector.extract_strided_slice %127 {offsets = [0, 256], sizes = [16, 128], strides = [1, 1]} : vector<16x384xf32> to vector<16x128xf32>
    %148 = vector.extract_strided_slice %130 {offsets = [0, 256], sizes = [16, 128], strides = [1, 1]} : vector<16x384xf32> to vector<16x128xf32>
    %149 = arith.addf %148, %5 : vector<16x128xf32>
    %150 = arith.mulf %138, %149 : vector<16x128xf32>
    %151 = arith.addf %147, %150 : vector<16x128xf32>
    %152 = math.tanh %151 : vector<16x128xf32>
    %cst_41 = arith.constant 1.000000e+00 : f32
    %153 = vector.broadcast %cst_41 : f32 to vector<16x128xf32>
    %154 = arith.subf %153, %146 : vector<16x128xf32>
    %155 = arith.mulf %154, %152 : vector<16x128xf32>
    %156 = arith.mulf %146, %118 : vector<16x128xf32>
    %157 = arith.addf %155, %156 : vector<16x128xf32>
    %158 = arith.truncf %157 : vector<16x128xf32> to vector<16x128xbf16>
    %159 = arith.index_cast %c3_i32 : i32 to index
    %c0_42 = arith.constant 0 : index
    %c0_43 = arith.constant 0 : index
    %160 = vector.load %arg6[%159, %c0_42, %c0_43] : memref<8x16x128xbf16, #tpu.memory_space<vmem>>, vector<1x16x128xbf16>
    %161 = vector.shape_cast %160 : vector<1x16x128xbf16> to vector<16x128xbf16>
    %162 = vector.shape_cast %158 : vector<16x128xbf16> to vector<1x16x128xbf16>
    tpu.vector_store %arg6[%159, %c0_42, %c0_43], %162 {strides = array<i32>} : memref<8x16x128xbf16, #tpu.memory_space<vmem>>, vector<1x16x128xbf16>,
    %c4_i32 = arith.constant 4 : i32
    %163 = arith.index_cast %c4_i32 : i32 to index
    %c0_44 = arith.constant 0 : index
    %c0_45 = arith.constant 0 : index
    %164 = vector.load %arg2[%163, %c0_44, %c0_45] : memref<8x16x384xbf16, #tpu.memory_space<vmem>>, vector<1x16x384xbf16>
    %165 = vector.shape_cast %164 : vector<1x16x384xbf16> to vector<16x384xbf16>
    %166 = arith.extf %165 : vector<16x384xbf16> to vector<16x384xf32>
    %167 = arith.truncf %157 : vector<16x128xf32> to vector<16x128xbf16>
    %c0_46 = arith.constant 0 : index
    %c0_47 = arith.constant 0 : index
    %168 = vector.load %arg4[%c0_46, %c0_47] : memref<128x384xbf16, #tpu.memory_space<vmem>>, vector<128x384xbf16>
    %cst_48 = arith.constant dense<0.000000e+00> : vector<16x384xf32>
    %169 = tpu.matmul %167, %168, %cst_48 {dimension_numbers = #tpu.dot_dimension_numbers<[1], [0], [0], [1], [0, 0, 1, 1], [], []>} : vector<16x128xbf16>, vector<128x384xbf16>, vector<16x384xf32> -> vector<16x384xf32>
    %170 = vector.extract_strided_slice %166 {offsets = [0, 0], sizes = [16, 128], strides = [1, 1]} : vector<16x384xf32> to vector<16x128xf32>
    %171 = vector.extract_strided_slice %169 {offsets = [0, 0], sizes = [16, 128], strides = [1, 1]} : vector<16x384xf32> to vector<16x128xf32>
    %172 = arith.addf %170, %171 : vector<16x128xf32>
    %173 = arith.negf %172 : vector<16x128xf32>
    %174 = math.exp %173 : vector<16x128xf32>
    %cst_49 = arith.constant 1.000000e+00 : f32
    %175 = vector.broadcast %cst_49 : f32 to vector<16x128xf32>
    %176 = arith.addf %175, %174 : vector<16x128xf32>
    %177 = arith.divf %175, %176 : vector<16x128xf32>
    %178 = vector.extract_strided_slice %166 {offsets = [0, 128], sizes = [16, 128], strides = [1, 1]} : vector<16x384xf32> to vector<16x128xf32>
    %179 = vector.extract_strided_slice %169 {offsets = [0, 128], sizes = [16, 128], strides = [1, 1]} : vector<16x384xf32> to vector<16x128xf32>
    %180 = arith.addf %178, %179 : vector<16x128xf32>
    %181 = arith.negf %180 : vector<16x128xf32>
    %182 = math.exp %181 : vector<16x128xf32>
    %cst_50 = arith.constant 1.000000e+00 : f32
    %183 = vector.broadcast %cst_50 : f32 to vector<16x128xf32>
    %184 = arith.addf %183, %182 : vector<16x128xf32>
    %185 = arith.divf %183, %184 : vector<16x128xf32>
    %186 = vector.extract_strided_slice %166 {offsets = [0, 256], sizes = [16, 128], strides = [1, 1]} : vector<16x384xf32> to vector<16x128xf32>
    %187 = vector.extract_strided_slice %169 {offsets = [0, 256], sizes = [16, 128], strides = [1, 1]} : vector<16x384xf32> to vector<16x128xf32>
    %188 = arith.addf %187, %5 : vector<16x128xf32>
    %189 = arith.mulf %177, %188 : vector<16x128xf32>
    %190 = arith.addf %186, %189 : vector<16x128xf32>
    %191 = math.tanh %190 : vector<16x128xf32>
    %cst_51 = arith.constant 1.000000e+00 : f32
    %192 = vector.broadcast %cst_51 : f32 to vector<16x128xf32>
    %193 = arith.subf %192, %185 : vector<16x128xf32>
    %194 = arith.mulf %193, %191 : vector<16x128xf32>
    %195 = arith.mulf %185, %157 : vector<16x128xf32>
    %196 = arith.addf %194, %195 : vector<16x128xf32>
    %197 = arith.truncf %196 : vector<16x128xf32> to vector<16x128xbf16>
    %198 = arith.index_cast %c4_i32 : i32 to index
    %c0_52 = arith.constant 0 : index
    %c0_53 = arith.constant 0 : index
    %199 = vector.load %arg6[%198, %c0_52, %c0_53] : memref<8x16x128xbf16, #tpu.memory_space<vmem>>, vector<1x16x128xbf16>
    %200 = vector.shape_cast %199 : vector<1x16x128xbf16> to vector<16x128xbf16>
    %201 = vector.shape_cast %197 : vector<16x128xbf16> to vector<1x16x128xbf16>
    tpu.vector_store %arg6[%198, %c0_52, %c0_53], %201 {strides = array<i32>} : memref<8x16x128xbf16, #tpu.memory_space<vmem>>, vector<1x16x128xbf16>,
    %c5_i32 = arith.constant 5 : i32
    %202 = arith.index_cast %c5_i32 : i32 to index
    %c0_54 = arith.constant 0 : index
    %c0_55 = arith.constant 0 : index
    %203 = vector.load %arg2[%202, %c0_54, %c0_55] : memref<8x16x384xbf16, #tpu.memory_space<vmem>>, vector<1x16x384xbf16>
    %204 = vector.shape_cast %203 : vector<1x16x384xbf16> to vector<16x384xbf16>
    %205 = arith.extf %204 : vector<16x384xbf16> to vector<16x384xf32>
    %206 = arith.truncf %196 : vector<16x128xf32> to vector<16x128xbf16>
    %c0_56 = arith.constant 0 : index
    %c0_57 = arith.constant 0 : index
    %207 = vector.load %arg4[%c0_56, %c0_57] : memref<128x384xbf16, #tpu.memory_space<vmem>>, vector<128x384xbf16>
    %cst_58 = arith.constant dense<0.000000e+00> : vector<16x384xf32>
    %208 = tpu.matmul %206, %207, %cst_58 {dimension_numbers = #tpu.dot_dimension_numbers<[1], [0], [0], [1], [0, 0, 1, 1], [], []>} : vector<16x128xbf16>, vector<128x384xbf16>, vector<16x384xf32> -> vector<16x384xf32>
    %209 = vector.extract_strided_slice %205 {offsets = [0, 0], sizes = [16, 128], strides = [1, 1]} : vector<16x384xf32> to vector<16x128xf32>
    %210 = vector.extract_strided_slice %208 {offsets = [0, 0], sizes = [16, 128], strides = [1, 1]} : vector<16x384xf32> to vector<16x128xf32>
    %211 = arith.addf %209, %210 : vector<16x128xf32>
    %212 = arith.negf %211 : vector<16x128xf32>
    %213 = math.exp %212 : vector<16x128xf32>
    %cst_59 = arith.constant 1.000000e+00 : f32
    %214 = vector.broadcast %cst_59 : f32 to vector<16x128xf32>
    %215 = arith.addf %214, %213 : vector<16x128xf32>
    %216 = arith.divf %214, %215 : vector<16x128xf32>
    %217 = vector.extract_strided_slice %205 {offsets = [0, 128], sizes = [16, 128], strides = [1, 1]} : vector<16x384xf32> to vector<16x128xf32>
    %218 = vector.extract_strided_slice %208 {offsets = [0, 128], sizes = [16, 128], strides = [1, 1]} : vector<16x384xf32> to vector<16x128xf32>
    %219 = arith.addf %217, %218 : vector<16x128xf32>
    %220 = arith.negf %219 : vector<16x128xf32>
    %221 = math.exp %220 : vector<16x128xf32>
    %cst_60 = arith.constant 1.000000e+00 : f32
    %222 = vector.broadcast %cst_60 : f32 to vector<16x128xf32>
    %223 = arith.addf %222, %221 : vector<16x128xf32>
    %224 = arith.divf %222, %223 : vector<16x128xf32>
    %225 = vector.extract_strided_slice %205 {offsets = [0, 256], sizes = [16, 128], strides = [1, 1]} : vector<16x384xf32> to vector<16x128xf32>
    %226 = vector.extract_strided_slice %208 {offsets = [0, 256], sizes = [16, 128], strides = [1, 1]} : vector<16x384xf32> to vector<16x128xf32>
    %227 = arith.addf %226, %5 : vector<16x128xf32>
    %228 = arith.mulf %216, %227 : vector<16x128xf32>
    %229 = arith.addf %225, %228 : vector<16x128xf32>
    %230 = math.tanh %229 : vector<16x128xf32>
    %cst_61 = arith.constant 1.000000e+00 : f32
    %231 = vector.broadcast %cst_61 : f32 to vector<16x128xf32>
    %232 = arith.subf %231, %224 : vector<16x128xf32>
    %233 = arith.mulf %232, %230 : vector<16x128xf32>
    %234 = arith.mulf %224, %196 : vector<16x128xf32>
    %235 = arith.addf %233, %234 : vector<16x128xf32>
    %236 = arith.truncf %235 : vector<16x128xf32> to vector<16x128xbf16>
    %237 = arith.index_cast %c5_i32 : i32 to index
    %c0_62 = arith.constant 0 : index
    %c0_63 = arith.constant 0 : index
    %238 = vector.load %arg6[%237, %c0_62, %c0_63] : memref<8x16x128xbf16, #tpu.memory_space<vmem>>, vector<1x16x128xbf16>
    %239 = vector.shape_cast %238 : vector<1x16x128xbf16> to vector<16x128xbf16>
    %240 = vector.shape_cast %236 : vector<16x128xbf16> to vector<1x16x128xbf16>
    tpu.vector_store %arg6[%237, %c0_62, %c0_63], %240 {strides = array<i32>} : memref<8x16x128xbf16, #tpu.memory_space<vmem>>, vector<1x16x128xbf16>,
    %c6_i32 = arith.constant 6 : i32
    %241 = arith.index_cast %c6_i32 : i32 to index
    %c0_64 = arith.constant 0 : index
    %c0_65 = arith.constant 0 : index
    %242 = vector.load %arg2[%241, %c0_64, %c0_65] : memref<8x16x384xbf16, #tpu.memory_space<vmem>>, vector<1x16x384xbf16>
    %243 = vector.shape_cast %242 : vector<1x16x384xbf16> to vector<16x384xbf16>
    %244 = arith.extf %243 : vector<16x384xbf16> to vector<16x384xf32>
    %245 = arith.truncf %235 : vector<16x128xf32> to vector<16x128xbf16>
    %c0_66 = arith.constant 0 : index
    %c0_67 = arith.constant 0 : index
    %246 = vector.load %arg4[%c0_66, %c0_67] : memref<128x384xbf16, #tpu.memory_space<vmem>>, vector<128x384xbf16>
    %cst_68 = arith.constant dense<0.000000e+00> : vector<16x384xf32>
    %247 = tpu.matmul %245, %246, %cst_68 {dimension_numbers = #tpu.dot_dimension_numbers<[1], [0], [0], [1], [0, 0, 1, 1], [], []>} : vector<16x128xbf16>, vector<128x384xbf16>, vector<16x384xf32> -> vector<16x384xf32>
    %248 = vector.extract_strided_slice %244 {offsets = [0, 0], sizes = [16, 128], strides = [1, 1]} : vector<16x384xf32> to vector<16x128xf32>
    %249 = vector.extract_strided_slice %247 {offsets = [0, 0], sizes = [16, 128], strides = [1, 1]} : vector<16x384xf32> to vector<16x128xf32>
    %250 = arith.addf %248, %249 : vector<16x128xf32>
    %251 = arith.negf %250 : vector<16x128xf32>
    %252 = math.exp %251 : vector<16x128xf32>
    %cst_69 = arith.constant 1.000000e+00 : f32
    %253 = vector.broadcast %cst_69 : f32 to vector<16x128xf32>
    %254 = arith.addf %253, %252 : vector<16x128xf32>
    %255 = arith.divf %253, %254 : vector<16x128xf32>
    %256 = vector.extract_strided_slice %244 {offsets = [0, 128], sizes = [16, 128], strides = [1, 1]} : vector<16x384xf32> to vector<16x128xf32>
    %257 = vector.extract_strided_slice %247 {offsets = [0, 128], sizes = [16, 128], strides = [1, 1]} : vector<16x384xf32> to vector<16x128xf32>
    %258 = arith.addf %256, %257 : vector<16x128xf32>
    %259 = arith.negf %258 : vector<16x128xf32>
    %260 = math.exp %259 : vector<16x128xf32>
    %cst_70 = arith.constant 1.000000e+00 : f32
    %261 = vector.broadcast %cst_70 : f32 to vector<16x128xf32>
    %262 = arith.addf %261, %260 : vector<16x128xf32>
    %263 = arith.divf %261, %262 : vector<16x128xf32>
    %264 = vector.extract_strided_slice %244 {offsets = [0, 256], sizes = [16, 128], strides = [1, 1]} : vector<16x384xf32> to vector<16x128xf32>
    %265 = vector.extract_strided_slice %247 {offsets = [0, 256], sizes = [16, 128], strides = [1, 1]} : vector<16x384xf32> to vector<16x128xf32>
    %266 = arith.addf %265, %5 : vector<16x128xf32>
    %267 = arith.mulf %255, %266 : vector<16x128xf32>
    %268 = arith.addf %264, %267 : vector<16x128xf32>
    %269 = math.tanh %268 : vector<16x128xf32>
    %cst_71 = arith.constant 1.000000e+00 : f32
    %270 = vector.broadcast %cst_71 : f32 to vector<16x128xf32>
    %271 = arith.subf %270, %263 : vector<16x128xf32>
    %272 = arith.mulf %271, %269 : vector<16x128xf32>
    %273 = arith.mulf %263, %235 : vector<16x128xf32>
    %274 = arith.addf %272, %273 : vector<16x128xf32>
    %275 = arith.truncf %274 : vector<16x128xf32> to vector<16x128xbf16>
    %276 = arith.index_cast %c6_i32 : i32 to index
    %c0_72 = arith.constant 0 : index
    %c0_73 = arith.constant 0 : index
    %277 = vector.load %arg6[%276, %c0_72, %c0_73] : memref<8x16x128xbf16, #tpu.memory_space<vmem>>, vector<1x16x128xbf16>
    %278 = vector.shape_cast %277 : vector<1x16x128xbf16> to vector<16x128xbf16>
    %279 = vector.shape_cast %275 : vector<16x128xbf16> to vector<1x16x128xbf16>
    tpu.vector_store %arg6[%276, %c0_72, %c0_73], %279 {strides = array<i32>} : memref<8x16x128xbf16, #tpu.memory_space<vmem>>, vector<1x16x128xbf16>,
    %c7_i32 = arith.constant 7 : i32
    %280 = arith.index_cast %c7_i32 : i32 to index
    %c0_74 = arith.constant 0 : index
    %c0_75 = arith.constant 0 : index
    %281 = vector.load %arg2[%280, %c0_74, %c0_75] : memref<8x16x384xbf16, #tpu.memory_space<vmem>>, vector<1x16x384xbf16>
    %282 = vector.shape_cast %281 : vector<1x16x384xbf16> to vector<16x384xbf16>
    %283 = arith.extf %282 : vector<16x384xbf16> to vector<16x384xf32>
    %284 = arith.truncf %274 : vector<16x128xf32> to vector<16x128xbf16>
    %c0_76 = arith.constant 0 : index
    %c0_77 = arith.constant 0 : index
    %285 = vector.load %arg4[%c0_76, %c0_77] : memref<128x384xbf16, #tpu.memory_space<vmem>>, vector<128x384xbf16>
    %cst_78 = arith.constant dense<0.000000e+00> : vector<16x384xf32>
    %286 = tpu.matmul %284, %285, %cst_78 {dimension_numbers = #tpu.dot_dimension_numbers<[1], [0], [0], [1], [0, 0, 1, 1], [], []>} : vector<16x128xbf16>, vector<128x384xbf16>, vector<16x384xf32> -> vector<16x384xf32>
    %287 = vector.extract_strided_slice %283 {offsets = [0, 0], sizes = [16, 128], strides = [1, 1]} : vector<16x384xf32> to vector<16x128xf32>
    %288 = vector.extract_strided_slice %286 {offsets = [0, 0], sizes = [16, 128], strides = [1, 1]} : vector<16x384xf32> to vector<16x128xf32>
    %289 = arith.addf %287, %288 : vector<16x128xf32>
    %290 = arith.negf %289 : vector<16x128xf32>
    %291 = math.exp %290 : vector<16x128xf32>
    %cst_79 = arith.constant 1.000000e+00 : f32
    %292 = vector.broadcast %cst_79 : f32 to vector<16x128xf32>
    %293 = arith.addf %292, %291 : vector<16x128xf32>
    %294 = arith.divf %292, %293 : vector<16x128xf32>
    %295 = vector.extract_strided_slice %283 {offsets = [0, 128], sizes = [16, 128], strides = [1, 1]} : vector<16x384xf32> to vector<16x128xf32>
    %296 = vector.extract_strided_slice %286 {offsets = [0, 128], sizes = [16, 128], strides = [1, 1]} : vector<16x384xf32> to vector<16x128xf32>
    %297 = arith.addf %295, %296 : vector<16x128xf32>
    %298 = arith.negf %297 : vector<16x128xf32>
    %299 = math.exp %298 : vector<16x128xf32>
    %cst_80 = arith.constant 1.000000e+00 : f32
    %300 = vector.broadcast %cst_80 : f32 to vector<16x128xf32>
    %301 = arith.addf %300, %299 : vector<16x128xf32>
    %302 = arith.divf %300, %301 : vector<16x128xf32>
    %303 = vector.extract_strided_slice %283 {offsets = [0, 256], sizes = [16, 128], strides = [1, 1]} : vector<16x384xf32> to vector<16x128xf32>
    %304 = vector.extract_strided_slice %286 {offsets = [0, 256], sizes = [16, 128], strides = [1, 1]} : vector<16x384xf32> to vector<16x128xf32>
    %305 = arith.addf %304, %5 : vector<16x128xf32>
    %306 = arith.mulf %294, %305 : vector<16x128xf32>
    %307 = arith.addf %303, %306 : vector<16x128xf32>
    %308 = math.tanh %307 : vector<16x128xf32>
    %cst_81 = arith.constant 1.000000e+00 : f32
    %309 = vector.broadcast %cst_81 : f32 to vector<16x128xf32>
    %310 = arith.subf %309, %302 : vector<16x128xf32>
    %311 = arith.mulf %310, %308 : vector<16x128xf32>
    %312 = arith.mulf %302, %274 : vector<16x128xf32>
    %313 = arith.addf %311, %312 : vector<16x128xf32>
    %314 = arith.truncf %313 : vector<16x128xf32> to vector<16x128xbf16>
    %315 = arith.index_cast %c7_i32 : i32 to index
    %c0_82 = arith.constant 0 : index
    %c0_83 = arith.constant 0 : index
    %316 = vector.load %arg6[%315, %c0_82, %c0_83] : memref<8x16x128xbf16, #tpu.memory_space<vmem>>, vector<1x16x128xbf16>
    %317 = vector.shape_cast %316 : vector<1x16x128xbf16> to vector<16x128xbf16>
    %318 = vector.shape_cast %314 : vector<16x128xbf16> to vector<1x16x128xbf16>
    tpu.vector_store %arg6[%315, %c0_82, %c0_83], %318 {strides = array<i32>} : memref<8x16x128xbf16, #tpu.memory_space<vmem>>, vector<1x16x128xbf16>,
    %c8_i32 = arith.constant 8 : i32
    %c0_84 = arith.constant 0 : index
    %c0_85 = arith.constant 0 : index
    %319 = vector.load %arg8[%c0_84, %c0_85] : memref<16x128xf32, #tpu.memory_space<vmem>>, vector<16x128xf32>
    tpu.vector_store %arg8[%c0_84, %c0_85], %313 {strides = array<i32>} : memref<16x128xf32, #tpu.memory_space<vmem>>, vector<16x128xf32>,
    %c0_i32_86 = arith.constant 0 : i32
    %320 = arith.cmpi eq, %arg1, %c0_i32_86 : i32
    %321 = arith.extui %320 : i1 to i32
    %c0_i32_87 = arith.constant 0 : i32
    %322 = arith.cmpi ne, %321, %c0_i32_87 : i32
    scf.if %322 {
      %c0_88 = arith.constant 0 : index
      %c0_89 = arith.constant 0 : index
      %323 = vector.load %arg7[%c0_88, %c0_89] : memref<16x128xf32, #tpu.memory_space<vmem>>, vector<16x128xf32>
      tpu.vector_store %arg7[%c0_88, %c0_89], %313 {strides = array<i32>} : memref<16x128xf32, #tpu.memory_space<vmem>>, vector<16x128xf32>,
    } else {
    }
    return
  }
  func.func @transform_0(%arg0: i32, %arg1: i32) -> (i32, i32, i32) {
    %c0_i32 = arith.constant 0 : i32
    %c0_i32_0 = arith.constant 0 : i32
    return %arg1, %arg0, %c0_i32 : i32, i32, i32
  }
  func.func @transform_1(%arg0: i32, %arg1: i32) -> (i32, i32) {
    %c0_i32 = arith.constant 0 : i32
    %c0_i32_0 = arith.constant 0 : i32
    return %arg0, %c0_i32 : i32, i32
  }
  func.func @transform_2(%arg0: i32, %arg1: i32) -> (i32, i32) {
    %c0_i32 = arith.constant 0 : i32
    %c0_i32_0 = arith.constant 0 : i32
    %c0_i32_1 = arith.constant 0 : i32
    return %c0_i32, %c0_i32_0 : i32, i32
  }
  func.func @transform_3(%arg0: i32, %arg1: i32) -> (i32, i32) {
    %c0_i32 = arith.constant 0 : i32
    %c0_i32_0 = arith.constant 0 : i32
    %c0_i32_1 = arith.constant 0 : i32
    return %c0_i32, %c0_i32_0 : i32, i32
  }
  func.func @transform_4(%arg0: i32, %arg1: i32) -> (i32, i32, i32) {
    %c0_i32 = arith.constant 0 : i32
    %c0_i32_0 = arith.constant 0 : i32
    return %arg1, %arg0, %c0_i32 : i32, i32, i32
  }
  func.func @transform_5(%arg0: i32, %arg1: i32) -> (i32, i32) {
    %c0_i32 = arith.constant 0 : i32
    %c0_i32_0 = arith.constant 0 : i32
    return %arg0, %c0_i32 : i32, i32
  }
}

</mosaic_0001>

<llo_original>
// kernel: recurrent_network_forward.1
$region0: #{recurrent_network_forward.1}
  #allocation0 [shape = 'u32[]', space=smem, size = 0x4, offset = 0x4, fixed_abs, tag = 'smem constant byte address 0x4 - core index']
  #allocation1 [shape = 'u32[144,128]{1,0:T(1,128)}', space=vmem, size = 0x12000, scoped, tag = 'internal scratch']
  #allocation2 [shape = 'f32[16,128]{1,0:T(8,128)}', space=vmem, size = 0x2000, scoped, tag = 'scratch operand']
  %s0 = inlined_call_operand.vmem [shape: bf16[8,16,384], index: 0, kind: input, shape index: {}]
  %s1 = inlined_call_operand.vmem [shape: f32[16,128], index: 1, kind: input, shape index: {}]
  %s2 = inlined_call_operand.vmem [shape: bf16[128,384], index: 2, kind: input, shape index: {}]
  %s3 = inlined_call_operand.vmem [shape: f32[1,128], index: 3, kind: input, shape index: {}]
  %s4 = inlined_call_operand.vmem [shape: bf16[8,16,128], index: 4, kind: output, shape index: {0}]
  %s5 = inlined_call_operand.vmem [shape: f32[16,128], index: 5, kind: output, shape index: {1}]
  %6 = xla_tuple %s4, %s5
  %s7 = sld [smem:[#allocation0]]
  $region42: #{recurrent_network_forward.1} parent=0
    _
  %s9 = ssub.s32 1, %s7
  %s10 = scalar_select 0, %s9, %s7
  // Predicated region
  $region2: #{recurrent_network_forward.1} parent=0 // pred_check
    _
  $region3: #{recurrent_network_forward.1} parent=0 // pred_check_branch
    %12 = sbr.rel (0) target = $region5
  $region4: #{recurrent_network_forward.1} parent=0 // pred_region
    _
  $region5: #{recurrent_network_forward.1} parent=0 // pred_fallthru
    _
  // Predicated region
  $region6: #{recurrent_network_forward.1} parent=0 // pred_check
    _
  $region7: #{recurrent_network_forward.1} parent=0 // pred_check_branch
    %14 = sbr.rel (0) target = $region9
  $region8: #{recurrent_network_forward.1} parent=0 // pred_region
    _
  $region9: #{recurrent_network_forward.1} parent=0 // pred_fallthru
    _
  // Predicated region
  $region10: #{recurrent_network_forward.1} parent=0 // pred_check
    _
  $region11: #{recurrent_network_forward.1} parent=0 // pred_check_branch
    %16 = sbr.rel (0) target = $region13
  $region12: #{recurrent_network_forward.1} parent=0 // pred_region
    _
  $region13: #{recurrent_network_forward.1} parent=0 // pred_fallthru
    _
  // Predicated region
  $region14: #{recurrent_network_forward.1} parent=0 // pred_check
    _
  $region15: #{recurrent_network_forward.1} parent=0 // pred_check_branch
    %18 = sbr.rel (0) target = $region17
  $region16: #{recurrent_network_forward.1} parent=0 // pred_region
    _
  $region17: #{recurrent_network_forward.1} parent=0 // pred_fallthru
    _
  %p20 = scmp.eq.s32.totalorder 0, 0
  // Predicated region
  $region18: #{recurrent_network_forward.1} parent=0 // pred_check
    %p21 = pneg %p20
  $region19: #{recurrent_network_forward.1} parent=0 // pred_check_branch
    %23 = sbr.rel (%p21) target = $region21
  $region20: #{recurrent_network_forward.1} parent=0 // pred_region
    %v24 = vld [vmem:[%s1] sm:$0xff]
    %v25 = vld [vmem:[%s1 + $0x8] sm:$0xff]
    %26 = vst [vmem:[#allocation2] sm:$0xff] %v24
    %27 = vst [vmem:[#allocation2 + $0x8] sm:$0xff] %v25
  $region21: #{recurrent_network_forward.1} parent=0 // pred_fallthru
    _
  %v28 = vld [vmem:[%s3] sm:$0x1]
  %v30 = vlaneseq
  %v31 = vshrl.u32 %v30, 7
  %v32 = vsub.s32 0, %v31
  %v33 = vrot.slane %v28, %v32
  %v35 = vld [vmem:[#allocation2] sm:$0xff]
  %v36 = vld [vmem:[#allocation2 + $0x8] sm:$0xff]
  %v37 = vld [vmem:[%s0] sm:$0xff]
  %v38 = vld [vmem:[%s0 + $0x8] sm:$0xf]
  %v39 = vld [vmem:[%s0 + $0xc] sm:$0xff]
  %v40 = vld [vmem:[%s0 + $0x14] sm:$0xf]
  %v41 = vunpack.c.l.bf16 %v37
  %v42 = vunpack.c.h.bf16 %v37
  %v43 = vunpack.c.l.bf16 %v38
  %v44 = vunpack.c.l.bf16 %v39
  %v45 = vunpack.c.h.bf16 %v39
  %v46 = vunpack.c.l.bf16 %v40
  %v47 = vpack.c.bf16 %v36, %v35
  %v48 = vld [vmem:[%s2] sm:$0xff]
  %v49 = vld [vmem:[%s2 + $0x8] sm:$0xf]
  %v50 = vld [vmem:[%s2 + $0xc] sm:$0xff]
  %v51 = vld [vmem:[%s2 + $0x14] sm:$0xf]
  %v52 = vld [vmem:[%s2 + $0x18] sm:$0xff]
  %v53 = vld [vmem:[%s2 + $0x20] sm:$0xf]
  %v54 = vld [vmem:[%s2 + $0x24] sm:$0xff]
  %v55 = vld [vmem:[%s2 + $0x2c] sm:$0xf]
  %v56 = vld [vmem:[%s2 + $0x30] sm:$0xff]
  %v57 = vld [vmem:[%s2 + $0x38] sm:$0xf]
  %v58 = vld [vmem:[%s2 + $0x3c] sm:$0xff]
  %v59 = vld [vmem:[%s2 + $0x44] sm:$0xf]
  %v60 = vld [vmem:[%s2 + $0x48] sm:$0xff]
  %v61 = vld [vmem:[%s2 + $0x50] sm:$0xf]
  %v62 = vld [vmem:[%s2 + $0x54] sm:$0xff]
  %v63 = vld [vmem:[%s2 + $0x5c] sm:$0xf]
  %v64 = vld [vmem:[%s2 + $0x60] sm:$0xff]
  %v65 = vld [vmem:[%s2 + $0x68] sm:$0xf]
  %v66 = vld [vmem:[%s2 + $0x6c] sm:$0xff]
  %v67 = vld [vmem:[%s2 + $0x74] sm:$0xf]
  %v68 = vld [vmem:[%s2 + $0x78] sm:$0xff]
  %v69 = vld [vmem:[%s2 + $0x80] sm:$0xf]
  %v70 = vld [vmem:[%s2 + $0x84] sm:$0xff]
  %v71 = vld [vmem:[%s2 + $0x8c] sm:$0xf]
  %v72 = vld [vmem:[%s2 + $0x90] sm:$0xff]
  %v73 = vld [vmem:[%s2 + $0x98] sm:$0xf]
  %v74 = vld [vmem:[%s2 + $0x9c] sm:$0xff]
  %v75 = vld [vmem:[%s2 + $0xa4] sm:$0xf]
  %v76 = vld [vmem:[%s2 + $0xa8] sm:$0xff]
  %v77 = vld [vmem:[%s2 + $0xb0] sm:$0xf]
  %v78 = vld [vmem:[%s2 + $0xb4] sm:$0xff]
  %v79 = vld [vmem:[%s2 + $0xbc] sm:$0xf]
  %v112 = vunpack.c.l.b16 %v48
  %v113 = vunpack.c.h.b16 %v48
  %v114 = vunpack.c.l.b16 %v49
  %v115 = vunpack.c.l.b16 %v50
  %v116 = vunpack.c.h.b16 %v50
  %v117 = vunpack.c.l.b16 %v51
  %v118 = vunpack.c.l.b16 %v52
  %v119 = vunpack.c.h.b16 %v52
  %v120 = vunpack.c.l.b16 %v53
  %v121 = vunpack.c.l.b16 %v54
  %v122 = vunpack.c.h.b16 %v54
  %v123 = vunpack.c.l.b16 %v55
  %v124 = vunpack.c.l.b16 %v56
  %v125 = vunpack.c.h.b16 %v56
  %v126 = vunpack.c.l.b16 %v57
  %v127 = vunpack.c.l.b16 %v58
  %v128 = vunpack.c.h.b16 %v58
  %v129 = vunpack.c.l.b16 %v59
  %v130 = vunpack.c.l.b16 %v60
  %v131 = vunpack.c.h.b16 %v60
  %v132 = vunpack.c.l.b16 %v61
  %v133 = vunpack.c.l.b16 %v62
  %v134 = vunpack.c.h.b16 %v62
  %v135 = vunpack.c.l.b16 %v63
  %v136 = vunpack.c.l.b16 %v64
  %v137 = vunpack.c.h.b16 %v64
  %v138 = vunpack.c.l.b16 %v65
  %v139 = vunpack.c.l.b16 %v66
  %v140 = vunpack.c.h.b16 %v66
  %v141 = vunpack.c.l.b16 %v67
  %v142 = vunpack.c.l.b16 %v68
  %v143 = vunpack.c.h.b16 %v68
  %v144 = vunpack.c.l.b16 %v69
  %v145 = vunpack.c.l.b16 %v70
  %v146 = vunpack.c.h.b16 %v70
  %v147 = vunpack.c.l.b16 %v71
  %v148 = vunpack.c.l.b16 %v72
  %v149 = vunpack.c.h.b16 %v72
  %v150 = vunpack.c.l.b16 %v73
  %v151 = vunpack.c.l.b16 %v74
  %v152 = vunpack.c.h.b16 %v74
  %v153 = vunpack.c.l.b16 %v75
  %v154 = vunpack.c.l.b16 %v76
  %v155 = vunpack.c.h.b16 %v76
  %v156 = vunpack.c.l.b16 %v77
  %v157 = vunpack.c.l.b16 %v78
  %v158 = vunpack.c.h.b16 %v78
  %v159 = vunpack.c.l.b16 %v79
  %v160 = vpack.c.b16 %v115, %v112
  %v161 = vpack.c.b16 %v116, %v113
  %v162 = vpack.c.b16 %v117, %v114
  %v163 = vpack.c.b16 %v121, %v118
  %v164 = vpack.c.b16 %v122, %v119
  %v165 = vpack.c.b16 %v123, %v120
  %v166 = vpack.c.b16 %v127, %v124
  %v167 = vpack.c.b16 %v128, %v125
  %v168 = vpack.c.b16 %v129, %v126
  %v169 = vpack.c.b16 %v133, %v130
  %v170 = vpack.c.b16 %v134, %v131
  %v171 = vpack.c.b16 %v135, %v132
  %v172 = vpack.c.b16 %v139, %v136
  %v173 = vpack.c.b16 %v140, %v137
  %v174 = vpack.c.b16 %v141, %v138
  %v175 = vpack.c.b16 %v145, %v142
  %v176 = vpack.c.b16 %v146, %v143
  %v177 = vpack.c.b16 %v147, %v144
  %v178 = vpack.c.b16 %v151, %v148
  %v179 = vpack.c.b16 %v152, %v149
  %v180 = vpack.c.b16 %v153, %v150
  %v181 = vpack.c.b16 %v157, %v154
  %v182 = vpack.c.b16 %v158, %v155
  %v183 = vpack.c.b16 %v159, %v156
  %208 = vmatprep.subr.bf16.mxu0 %v161
  %209 = vmatpush1.bf16.msra.mxu0 %v160
  %210 = vmatprep.subr.bf16.mxu0 %v164
  %211 = vmatpush1.bf16.msra.mxu0 %v163
  %212 = vmatprep.subr.bf16.mxu0 %v167
  %213 = vmatpush1.bf16.msra.mxu0 %v166
  %214 = vmatprep.subr.bf16.mxu0 %v170
  %215 = vmatpush1.bf16.msra.mxu0 %v169
  %216 = vmatprep.subr.bf16.mxu0 %v173
  %217 = vmatpush1.bf16.msra.mxu0 %v172
  %218 = vmatprep.subr.bf16.mxu0 %v176
  %219 = vmatpush1.bf16.msra.mxu0 %v175
  %220 = vmatprep.subr.bf16.mxu0 %v179
  %221 = vmatpush1.bf16.msra.mxu0 %v178
  %222 = vmatprep.subr.bf16.mxu0 %v182
  %223 = vmatpush1.bf16.msra.mxu0 %v181
  %224 = vmatprep.subr.bf16.mxu0 0
  %225 = vmatpush1.bf16.msra.mxu0 0
  %226 = vmatprep.subr.bf16.mxu0 0
  %227 = vmatpush1.bf16.msra.mxu0 0
  %228 = vmatprep.subr.bf16.mxu0 0
  %229 = vmatpush1.bf16.msra.mxu0 0
  %230 = vmatprep.subr.bf16.mxu0 0
  %231 = vmatpush1.bf16.msra.mxu0 0
  %232 = vmatprep.subr.bf16.mxu0 0
  %233 = vmatpush1.bf16.msra.mxu0 0
  %234 = vmatprep.subr.bf16.mxu0 0
  %235 = vmatpush1.bf16.msra.mxu0 0
  %236 = vmatprep.subr.bf16.mxu0 0
  %237 = vmatpush1.bf16.msra.mxu0 0
  %238 = vmatprep.subr.bf16.mxu0 0
  %239 = vmatpush1.bf16.msra.mxu0 0
  %240 = vmatprep.mubr.bf16.mxu0 0
  %241 = vmatmul.mubr.bf16.gmra.mrb[0].mxu0 %v47
  %v242 = vpop.f32.mrb[0].mxu0
  %v243 = vadd.f32 0.0, %v242
  %v244 = vpop.f32.mrb[0].mxu0
  %v245 = vadd.f32 0.0, %v244
  %v246 = vpop.f32.mrb[0].mxu0
  %v247 = vadd.f32 0.0, %v246
  %v248 = vpop.f32.mrb[0].mxu0
  %v249 = vadd.f32 0.0, %v248
  %250 = vdwg.mxu0
  %251 = vmatprep.subr.bf16.mxu0 0
  %252 = vmatpush1.bf16.msra.mxu0 %v162
  %253 = vmatprep.subr.bf16.mxu0 0
  %254 = vmatpush1.bf16.msra.mxu0 %v165
  %255 = vmatprep.subr.bf16.mxu0 0
  %256 = vmatpush1.bf16.msra.mxu0 %v168
  %257 = vmatprep.subr.bf16.mxu0 0
  %258 = vmatpush1.bf16.msra.mxu0 %v171
  %259 = vmatprep.subr.bf16.mxu0 0
  %260 = vmatpush1.bf16.msra.mxu0 %v174
  %261 = vmatprep.subr.bf16.mxu0 0
  %262 = vmatpush1.bf16.msra.mxu0 %v177
  %263 = vmatprep.subr.bf16.mxu0 0
  %264 = vmatpush1.bf16.msra.mxu0 %v180
  %265 = vmatprep.subr.bf16.mxu0 0
  %266 = vmatpush1.bf16.msra.mxu0 %v183
  %267 = vmatprep.subr.bf16.mxu0 0
  %268 = vmatpush1.bf16.msra.mxu0 0
  %269 = vmatprep.subr.bf16.mxu0 0
  %270 = vmatpush1.bf16.msra.mxu0 0
  %271 = vmatprep.subr.bf16.mxu0 0
  %272 = vmatpush1.bf16.msra.mxu0 0
  %273 = vmatprep.subr.bf16.mxu0 0
  %274 = vmatpush1.bf16.msra.mxu0 0
  %275 = vmatprep.subr.bf16.mxu0 0
  %276 = vmatpush1.bf16.msra.mxu0 0
  %277 = vmatprep.subr.bf16.mxu0 0
  %278 = vmatpush1.bf16.msra.mxu0 0
  %279 = vmatprep.subr.bf16.mxu0 0
  %280 = vmatpush1.bf16.msra.mxu0 0
  %281 = vmatprep.subr.bf16.mxu0 0
  %282 = vmatpush1.bf16.msra.mxu0 0
  %283 = vmatprep.mubr.bf16.mxu0 0
  %284 = vmatmul.mubr.bf16.gmra.mrb[0].mxu0 %v47
  %v285 = vpop.f32.mrb[0].mxu0
  %v286 = vadd.f32 0.0, %v285
  %v287 = vpop.f32.mrb[0].mxu0
  %v288 = vpop.f32.mrb[0].mxu0
  %v289 = vadd.f32 0.0, %v288
  %v290 = vpop.f32.mrb[0].mxu0
  %291 = vdwg.mxu0
  %v292 = vadd.f32 %v41, %v243
  %v293 = vadd.f32 %v44, %v247
  %v294 = vxor.u32 %v292, 2147483648
  %v295 = vxor.u32 %v293, 2147483648
  %v296 = vmul.f32 %v294, 1.442695
  %v297 = vpow.pop %v296
  %v298 = vmul.f32 %v295, 1.442695
  %v299 = vpow.pop %v298
  %v300 = vadd.f32 %v297, 1.0
  %v301 = vadd.f32 %v299, 1.0
  %v302 = vrcp.pop %v300
  %v303 = vmul.f32 1.0, %v302
  %v304 = vrcp.pop %v301
  %v305 = vmul.f32 1.0, %v304
  %v306 = vadd.f32 %v42, %v245
  %v307 = vadd.f32 %v45, %v249
  %v308 = vxor.u32 %v306, 2147483648
  %v309 = vxor.u32 %v307, 2147483648
  %v310 = vmul.f32 %v308, 1.442695
  %v311 = vpow.pop %v310
  %v312 = vmul.f32 %v309, 1.442695
  %v313 = vpow.pop %v312
  %v314 = vadd.f32 %v311, 1.0
  %v315 = vadd.f32 %v313, 1.0
  %v316 = vrcp.pop %v314
  %v317 = vmul.f32 1.0, %v316
  %v318 = vrcp.pop %v315
  %v319 = vmul.f32 1.0, %v318
  %v320 = vadd.f32 %v286, %v33
  %v321 = vadd.f32 %v289, %v33
  %v322 = vmul.f32 %v303, %v320
  %v323 = vmul.f32 %v305, %v321
  %v324 = vadd.f32 %v43, %v322
  %v325 = vadd.f32 %v46, %v323
  %v326 = vtanh.pop %v324
  %v327 = vtanh.pop %v325
  %v328 = vsub.f32 1.0, %v317
  %v329 = vsub.f32 1.0, %v319
  %v330 = vmul.f32 %v328, %v326
  %v331 = vmul.f32 %v329, %v327
  %v332 = vmul.f32 %v317, %v35
  %v333 = vmul.f32 %v319, %v36
  %v334 = vadd.f32 %v330, %v332
  %v335 = vadd.f32 %v331, %v333
  %v336 = vpack.c.bf16 %v335, %v334
  %v338 = vunpack.c.l.b16 %v336
  %v339 = vunpack.c.h.b16 %v336
  %v340 = vpack.c.b16 %v338, %v338
  %v341 = vpack.c.b16 %v339, %v339
  %344 = vst [vmem:[%s4] sm:$0xf] %v340
  %345 = vst [vmem:[%s4 + $0x4] sm:$0xf] %v341
  %s346 = scalar_lea.vmem %s0, 24
  %v347 = vld [vmem:[%s346] sm:$0xff]
  %v348 = vld [vmem:[%s346 + $0x8] sm:$0xf]
  %v349 = vld [vmem:[%s346 + $0xc] sm:$0xff]
  %v350 = vld [vmem:[%s346 + $0x14] sm:$0xf]
  %v351 = vunpack.c.l.bf16 %v347
  %v352 = vunpack.c.h.bf16 %v347
  %v353 = vunpack.c.l.bf16 %v348
  %v354 = vunpack.c.l.bf16 %v349
  %v355 = vunpack.c.h.bf16 %v349
  %v356 = vunpack.c.l.bf16 %v350
  %v357 = vld [vmem:[%s2] sm:$0xff]
  %v358 = vld [vmem:[%s2 + $0x8] sm:$0xf]
  %v359 = vld [vmem:[%s2 + $0xc] sm:$0xff]
  %v360 = vld [vmem:[%s2 + $0x14] sm:$0xf]
  %v361 = vld [vmem:[%s2 + $0x18] sm:$0xff]
  %v362 = vld [vmem:[%s2 + $0x20] sm:$0xf]
  %v363 = vld [vmem:[%s2 + $0x24] sm:$0xff]
  %v364 = vld [vmem:[%s2 + $0x2c] sm:$0xf]
  %v365 = vld [vmem:[%s2 + $0x30] sm:$0xff]
  %v366 = vld [vmem:[%s2 + $0x38] sm:$0xf]
  %v367 = vld [vmem:[%s2 + $0x3c] sm:$0xff]
  %v368 = vld [vmem:[%s2 + $0x44] sm:$0xf]
  %v369 = vld [vmem:[%s2 + $0x48] sm:$0xff]
  %v370 = vld [vmem:[%s2 + $0x50] sm:$0xf]
  %v371 = vld [vmem:[%s2 + $0x54] sm:$0xff]
  %v372 = vld [vmem:[%s2 + $0x5c] sm:$0xf]
  %v373 = vld [vmem:[%s2 + $0x60] sm:$0xff]
  %v374 = vld [vmem:[%s2 + $0x68] sm:$0xf]
  %v375 = vld [vmem:[%s2 + $0x6c] sm:$0xff]
  %v376 = vld [vmem:[%s2 + $0x74] sm:$0xf]
  %v377 = vld [vmem:[%s2 + $0x78] sm:$0xff]
  %v378 = vld [vmem:[%s2 + $0x80] sm:$0xf]
  %v379 = vld [vmem:[%s2 + $0x84] sm:$0xff]
  %v380 = vld [vmem:[%s2 + $0x8c] sm:$0xf]
  %v381 = vld [vmem:[%s2 + $0x90] sm:$0xff]
  %v382 = vld [vmem:[%s2 + $0x98] sm:$0xf]
  %v383 = vld [vmem:[%s2 + $0x9c] sm:$0xff]
  %v384 = vld [vmem:[%s2 + $0xa4] sm:$0xf]
  %v385 = vld [vmem:[%s2 + $0xa8] sm:$0xff]
  %v386 = vld [vmem:[%s2 + $0xb0] sm:$0xf]
  %v387 = vld [vmem:[%s2 + $0xb4] sm:$0xff]
  %v388 = vld [vmem:[%s2 + $0xbc] sm:$0xf]
  %v421 = vunpack.c.l.b16 %v357
  %v422 = vunpack.c.h.b16 %v357
  %v423 = vunpack.c.l.b16 %v358
  %v424 = vunpack.c.l.b16 %v359
  %v425 = vunpack.c.h.b16 %v359
  %v426 = vunpack.c.l.b16 %v360
  %v427 = vunpack.c.l.b16 %v361
  %v428 = vunpack.c.h.b16 %v361
  %v429 = vunpack.c.l.b16 %v362
  %v430 = vunpack.c.l.b16 %v363
  %v431 = vunpack.c.h.b16 %v363
  %v432 = vunpack.c.l.b16 %v364
  %v433 = vunpack.c.l.b16 %v365
  %v434 = vunpack.c.h.b16 %v365
  %v435 = vunpack.c.l.b16 %v366
  %v436 = vunpack.c.l.b16 %v367
  %v437 = vunpack.c.h.b16 %v367
  %v438 = vunpack.c.l.b16 %v368
  %v439 = vunpack.c.l.b16 %v369
  %v440 = vunpack.c.h.b16 %v369
  %v441 = vunpack.c.l.b16 %v370
  %v442 = vunpack.c.l.b16 %v371
  %v443 = vunpack.c.h.b16 %v371
  %v444 = vunpack.c.l.b16 %v372
  %v445 = vunpack.c.l.b16 %v373
  %v446 = vunpack.c.h.b16 %v373
  %v447 = vunpack.c.l.b16 %v374
  %v448 = vunpack.c.l.b16 %v375
  %v449 = vunpack.c.h.b16 %v375
  %v450 = vunpack.c.l.b16 %v376
  %v451 = vunpack.c.l.b16 %v377
  %v452 = vunpack.c.h.b16 %v377
  %v453 = vunpack.c.l.b16 %v378
  %v454 = vunpack.c.l.b16 %v379
  %v455 = vunpack.c.h.b16 %v379
  %v456 = vunpack.c.l.b16 %v380
  %v457 = vunpack.c.l.b16 %v381
  %v458 = vunpack.c.h.b16 %v381
  %v459 = vunpack.c.l.b16 %v382
  %v460 = vunpack.c.l.b16 %v383
  %v461 = vunpack.c.h.b16 %v383
  %v462 = vunpack.c.l.b16 %v384
  %v463 = vunpack.c.l.b16 %v385
  %v464 = vunpack.c.h.b16 %v385
  %v465 = vunpack.c.l.b16 %v386
  %v466 = vunpack.c.l.b16 %v387
  %v467 = vunpack.c.h.b16 %v387
  %v468 = vunpack.c.l.b16 %v388
  %v469 = vpack.c.b16 %v424, %v421
  %v470 = vpack.c.b16 %v425, %v422
  %v471 = vpack.c.b16 %v426, %v423
  %v472 = vpack.c.b16 %v430, %v427
  %v473 = vpack.c.b16 %v431, %v428
  %v474 = vpack.c.b16 %v432, %v429
  %v475 = vpack.c.b16 %v436, %v433
  %v476 = vpack.c.b16 %v437, %v434
  %v477 = vpack.c.b16 %v438, %v435
  %v478 = vpack.c.b16 %v442, %v439
  %v479 = vpack.c.b16 %v443, %v440
  %v480 = vpack.c.b16 %v444, %v441
  %v481 = vpack.c.b16 %v448, %v445
  %v482 = vpack.c.b16 %v449, %v446
  %v483 = vpack.c.b16 %v450, %v447
  %v484 = vpack.c.b16 %v454, %v451
  %v485 = vpack.c.b16 %v455, %v452
  %v486 = vpack.c.b16 %v456, %v453
  %v487 = vpack.c.b16 %v460, %v457
  %v488 = vpack.c.b16 %v461, %v458
  %v489 = vpack.c.b16 %v462, %v459
  %v490 = vpack.c.b16 %v466, %v463
  %v491 = vpack.c.b16 %v467, %v464
  %v492 = vpack.c.b16 %v468, %v465
  %517 = vmatprep.subr.bf16.mxu0 %v470
  %518 = vmatpush1.bf16.msra.mxu0 %v469
  %519 = vmatprep.subr.bf16.mxu0 %v473
  %520 = vmatpush1.bf16.msra.mxu0 %v472
  %521 = vmatprep.subr.bf16.mxu0 %v476
  %522 = vmatpush1.bf16.msra.mxu0 %v475
  %523 = vmatprep.subr.bf16.mxu0 %v479
  %524 = vmatpush1.bf16.msra.mxu0 %v478
  %525 = vmatprep.subr.bf16.mxu0 %v482
  %526 = vmatpush1.bf16.msra.mxu0 %v481
  %527 = vmatprep.subr.bf16.mxu0 %v485
  %528 = vmatpush1.bf16.msra.mxu0 %v484
  %529 = vmatprep.subr.bf16.mxu0 %v488
  %530 = vmatpush1.bf16.msra.mxu0 %v487
  %531 = vmatprep.subr.bf16.mxu0 %v491
  %532 = vmatpush1.bf16.msra.mxu0 %v490
  %533 = vmatprep.subr.bf16.mxu0 0
  %534 = vmatpush1.bf16.msra.mxu0 0
  %535 = vmatprep.subr.bf16.mxu0 0
  %536 = vmatpush1.bf16.msra.mxu0 0
  %537 = vmatprep.subr.bf16.mxu0 0
  %538 = vmatpush1.bf16.msra.mxu0 0
  %539 = vmatprep.subr.bf16.mxu0 0
  %540 = vmatpush1.bf16.msra.mxu0 0
  %541 = vmatprep.subr.bf16.mxu0 0
  %542 = vmatpush1.bf16.msra.mxu0 0
  %543 = vmatprep.subr.bf16.mxu0 0
  %544 = vmatpush1.bf16.msra.mxu0 0
  %545 = vmatprep.subr.bf16.mxu0 0
  %546 = vmatpush1.bf16.msra.mxu0 0
  %547 = vmatprep.subr.bf16.mxu0 0
  %548 = vmatpush1.bf16.msra.mxu0 0
  %549 = vmatprep.mubr.bf16.mxu0 0
  %550 = vmatmul.mubr.bf16.gmra.mrb[0].mxu0 %v336
  %v551 = vpop.f32.mrb[0].mxu0
  %v552 = vadd.f32 0.0, %v551
  %v553 = vpop.f32.mrb[0].mxu0
  %v554 = vadd.f32 0.0, %v553
  %v555 = vpop.f32.mrb[0].mxu0
  %v556 = vadd.f32 0.0, %v555
  %v557 = vpop.f32.mrb[0].mxu0
  %v558 = vadd.f32 0.0, %v557
  %559 = vdwg.mxu0
  %560 = vmatprep.subr.bf16.mxu0 0
  %561 = vmatpush1.bf16.msra.mxu0 %v471
  %562 = vmatprep.subr.bf16.mxu0 0
  %563 = vmatpush1.bf16.msra.mxu0 %v474
  %564 = vmatprep.subr.bf16.mxu0 0
  %565 = vmatpush1.bf16.msra.mxu0 %v477
  %566 = vmatprep.subr.bf16.mxu0 0
  %567 = vmatpush1.bf16.msra.mxu0 %v480
  %568 = vmatprep.subr.bf16.mxu0 0
  %569 = vmatpush1.bf16.msra.mxu0 %v483
  %570 = vmatprep.subr.bf16.mxu0 0
  %571 = vmatpush1.bf16.msra.mxu0 %v486
  %572 = vmatprep.subr.bf16.mxu0 0
  %573 = vmatpush1.bf16.msra.mxu0 %v489
  %574 = vmatprep.subr.bf16.mxu0 0
  %575 = vmatpush1.bf16.msra.mxu0 %v492
  %576 = vmatprep.subr.bf16.mxu0 0
  %577 = vmatpush1.bf16.msra.mxu0 0
  %578 = vmatprep.subr.bf16.mxu0 0
  %579 = vmatpush1.bf16.msra.mxu0 0
  %580 = vmatprep.subr.bf16.mxu0 0
  %581 = vmatpush1.bf16.msra.mxu0 0
  %582 = vmatprep.subr.bf16.mxu0 0
  %583 = vmatpush1.bf16.msra.mxu0 0
  %584 = vmatprep.subr.bf16.mxu0 0
  %585 = vmatpush1.bf16.msra.mxu0 0
  %586 = vmatprep.subr.bf16.mxu0 0
  %587 = vmatpush1.bf16.msra.mxu0 0
  %588 = vmatprep.subr.bf16.mxu0 0
  %589 = vmatpush1.bf16.msra.mxu0 0
  %590 = vmatprep.subr.bf16.mxu0 0
  %591 = vmatpush1.bf16.msra.mxu0 0
  %592 = vmatprep.mubr.bf16.mxu0 0
  %593 = vmatmul.mubr.bf16.gmra.mrb[0].mxu0 %v336
  %v594 = vpop.f32.mrb[0].mxu0
  %v595 = vadd.f32 0.0, %v594
  %v596 = vpop.f32.mrb[0].mxu0
  %v597 = vpop.f32.mrb[0].mxu0
  %v598 = vadd.f32 0.0, %v597
  %v599 = vpop.f32.mrb[0].mxu0
  %600 = vdwg.mxu0
  %v601 = vadd.f32 %v351, %v552
  %v602 = vadd.f32 %v354, %v556
  %v603 = vxor.u32 %v601, 2147483648
  %v604 = vxor.u32 %v602, 2147483648
  %v605 = vmul.f32 %v603, 1.442695
  %v606 = vpow.pop %v605
  %v607 = vmul.f32 %v604, 1.442695
  %v608 = vpow.pop %v607
  %v609 = vadd.f32 %v606, 1.0
  %v610 = vadd.f32 %v608, 1.0
  %v611 = vrcp.pop %v609
  %v612 = vmul.f32 1.0, %v611
  %v613 = vrcp.pop %v610
  %v614 = vmul.f32 1.0, %v613
  %v615 = vadd.f32 %v352, %v554
  %v616 = vadd.f32 %v355, %v558
  %v617 = vxor.u32 %v615, 2147483648
  %v618 = vxor.u32 %v616, 2147483648
  %v619 = vmul.f32 %v617, 1.442695
  %v620 = vpow.pop %v619
  %v621 = vmul.f32 %v618, 1.442695
  %v622 = vpow.pop %v621
  %v623 = vadd.f32 %v620, 1.0
  %v624 = vadd.f32 %v622, 1.0
  %v625 = vrcp.pop %v623
  %v626 = vmul.f32 1.0, %v625
  %v627 = vrcp.pop %v624
  %v628 = vmul.f32 1.0, %v627
  %v629 = vadd.f32 %v595, %v33
  %v630 = vadd.f32 %v598, %v33
  %v631 = vmul.f32 %v612, %v629
  %v632 = vmul.f32 %v614, %v630
  %v633 = vadd.f32 %v353, %v631
  %v634 = vadd.f32 %v356, %v632
  %v635 = vtanh.pop %v633
  %v636 = vtanh.pop %v634
  %v637 = vsub.f32 1.0, %v626
  %v638 = vsub.f32 1.0, %v628
  %v639 = vmul.f32 %v637, %v635
  %v640 = vmul.f32 %v638, %v636
  %v641 = vmul.f32 %v626, %v334
  %v642 = vmul.f32 %v628, %v335
  %v643 = vadd.f32 %v639, %v641
  %v644 = vadd.f32 %v640, %v642
  %v645 = vpack.c.bf16 %v644, %v643
  %v647 = vunpack.c.l.b16 %v645
  %v648 = vunpack.c.h.b16 %v645
  %v649 = vpack.c.b16 %v647, %v647
  %v650 = vpack.c.b16 %v648, %v648
  %s653 = scalar_lea.vmem %s4, 8
  %654 = vst [vmem:[%s653] sm:$0xf] %v649
  %655 = vst [vmem:[%s653 + $0x4] sm:$0xf] %v650
  %s656 = scalar_lea.vmem %s0, 48
  %v657 = vld [vmem:[%s656] sm:$0xff]
  %v658 = vld [vmem:[%s656 + $0x8] sm:$0xf]
  %v659 = vld [vmem:[%s656 + $0xc] sm:$0xff]
  %v660 = vld [vmem:[%s656 + $0x14] sm:$0xf]
  %v661 = vunpack.c.l.bf16 %v657
  %v662 = vunpack.c.h.bf16 %v657
  %v663 = vunpack.c.l.bf16 %v658
  %v664 = vunpack.c.l.bf16 %v659
  %v665 = vunpack.c.h.bf16 %v659
  %v666 = vunpack.c.l.bf16 %v660
  %v667 = vld [vmem:[%s2] sm:$0xff]
  %v668 = vld [vmem:[%s2 + $0x8] sm:$0xf]
  %v669 = vld [vmem:[%s2 + $0xc] sm:$0xff]
  %v670 = vld [vmem:[%s2 + $0x14] sm:$0xf]
  %v671 = vld [vmem:[%s2 + $0x18] sm:$0xff]
  %v672 = vld [vmem:[%s2 + $0x20] sm:$0xf]
  %v673 = vld [vmem:[%s2 + $0x24] sm:$0xff]
  %v674 = vld [vmem:[%s2 + $0x2c] sm:$0xf]
  %v675 = vld [vmem:[%s2 + $0x30] sm:$0xff]
  %v676 = vld [vmem:[%s2 + $0x38] sm:$0xf]
  %v677 = vld [vmem:[%s2 + $0x3c] sm:$0xff]
  %v678 = vld [vmem:[%s2 + $0x44] sm:$0xf]
  %v679 = vld [vmem:[%s2 + $0x48] sm:$0xff]
  %v680 = vld [vmem:[%s2 + $0x50] sm:$0xf]
  %v681 = vld [vmem:[%s2 + $0x54] sm:$0xff]
  %v682 = vld [vmem:[%s2 + $0x5c] sm:$0xf]
  %v683 = vld [vmem:[%s2 + $0x60] sm:$0xff]
  %v684 = vld [vmem:[%s2 + $0x68] sm:$0xf]
  %v685 = vld [vmem:[%s2 + $0x6c] sm:$0xff]
  %v686 = vld [vmem:[%s2 + $0x74] sm:$0xf]
  %v687 = vld [vmem:[%s2 + $0x78] sm:$0xff]
  %v688 = vld [vmem:[%s2 + $0x80] sm:$0xf]
  %v689 = vld [vmem:[%s2 + $0x84] sm:$0xff]
  %v690 = vld [vmem:[%s2 + $0x8c] sm:$0xf]
  %v691 = vld [vmem:[%s2 + $0x90] sm:$0xff]
  %v692 = vld [vmem:[%s2 + $0x98] sm:$0xf]
  %v693 = vld [vmem:[%s2 + $0x9c] sm:$0xff]
  %v694 = vld [vmem:[%s2 + $0xa4] sm:$0xf]
  %v695 = vld [vmem:[%s2 + $0xa8] sm:$0xff]
  %v696 = vld [vmem:[%s2 + $0xb0] sm:$0xf]
  %v697 = vld [vmem:[%s2 + $0xb4] sm:$0xff]
  %v698 = vld [vmem:[%s2 + $0xbc] sm:$0xf]
  %v731 = vunpack.c.l.b16 %v667
  %v732 = vunpack.c.h.b16 %v667
  %v733 = vunpack.c.l.b16 %v668
  %v734 = vunpack.c.l.b16 %v669
  %v735 = vunpack.c.h.b16 %v669
  %v736 = vunpack.c.l.b16 %v670
  %v737 = vunpack.c.l.b16 %v671
  %v738 = vunpack.c.h.b16 %v671
  %v739 = vunpack.c.l.b16 %v672
  %v740 = vunpack.c.l.b16 %v673
  %v741 = vunpack.c.h.b16 %v673
  %v742 = vunpack.c.l.b16 %v674
  %v743 = vunpack.c.l.b16 %v675
  %v744 = vunpack.c.h.b16 %v675
  %v745 = vunpack.c.l.b16 %v676
  %v746 = vunpack.c.l.b16 %v677
  %v747 = vunpack.c.h.b16 %v677
  %v748 = vunpack.c.l.b16 %v678
  %v749 = vunpack.c.l.b16 %v679
  %v750 = vunpack.c.h.b16 %v679
  %v751 = vunpack.c.l.b16 %v680
  %v752 = vunpack.c.l.b16 %v681
  %v753 = vunpack.c.h.b16 %v681
  %v754 = vunpack.c.l.b16 %v682
  %v755 = vunpack.c.l.b16 %v683
  %v756 = vunpack.c.h.b16 %v683
  %v757 = vunpack.c.l.b16 %v684
  %v758 = vunpack.c.l.b16 %v685
  %v759 = vunpack.c.h.b16 %v685
  %v760 = vunpack.c.l.b16 %v686
  %v761 = vunpack.c.l.b16 %v687
  %v762 = vunpack.c.h.b16 %v687
  %v763 = vunpack.c.l.b16 %v688
  %v764 = vunpack.c.l.b16 %v689
  %v765 = vunpack.c.h.b16 %v689
  %v766 = vunpack.c.l.b16 %v690
  %v767 = vunpack.c.l.b16 %v691
  %v768 = vunpack.c.h.b16 %v691
  %v769 = vunpack.c.l.b16 %v692
  %v770 = vunpack.c.l.b16 %v693
  %v771 = vunpack.c.h.b16 %v693
  %v772 = vunpack.c.l.b16 %v694
  %v773 = vunpack.c.l.b16 %v695
  %v774 = vunpack.c.h.b16 %v695
  %v775 = vunpack.c.l.b16 %v696
  %v776 = vunpack.c.l.b16 %v697
  %v777 = vunpack.c.h.b16 %v697
  %v778 = vunpack.c.l.b16 %v698
  %v779 = vpack.c.b16 %v734, %v731
  %v780 = vpack.c.b16 %v735, %v732
  %v781 = vpack.c.b16 %v736, %v733
  %v782 = vpack.c.b16 %v740, %v737
  %v783 = vpack.c.b16 %v741, %v738
  %v784 = vpack.c.b16 %v742, %v739
  %v785 = vpack.c.b16 %v746, %v743
  %v786 = vpack.c.b16 %v747, %v744
  %v787 = vpack.c.b16 %v748, %v745
  %v788 = vpack.c.b16 %v752, %v749
  %v789 = vpack.c.b16 %v753, %v750
  %v790 = vpack.c.b16 %v754, %v751
  %v791 = vpack.c.b16 %v758, %v755
  %v792 = vpack.c.b16 %v759, %v756
  %v793 = vpack.c.b16 %v760, %v757
  %v794 = vpack.c.b16 %v764, %v761
  %v795 = vpack.c.b16 %v765, %v762
  %v796 = vpack.c.b16 %v766, %v763
  %v797 = vpack.c.b16 %v770, %v767
  %v798 = vpack.c.b16 %v771, %v768
  %v799 = vpack.c.b16 %v772, %v769
  %v800 = vpack.c.b16 %v776, %v773
  %v801 = vpack.c.b16 %v777, %v774
  %v802 = vpack.c.b16 %v778, %v775
  %827 = vmatprep.subr.bf16.mxu0 %v780
  %828 = vmatpush1.bf16.msra.mxu0 %v779
  %829 = vmatprep.subr.bf16.mxu0 %v783
  %830 = vmatpush1.bf16.msra.mxu0 %v782
  %831 = vmatprep.subr.bf16.mxu0 %v786
  %832 = vmatpush1.bf16.msra.mxu0 %v785
  %833 = vmatprep.subr.bf16.mxu0 %v789
  %834 = vmatpush1.bf16.msra.mxu0 %v788
  %835 = vmatprep.subr.bf16.mxu0 %v792
  %836 = vmatpush1.bf16.msra.mxu0 %v791
  %837 = vmatprep.subr.bf16.mxu0 %v795
  %838 = vmatpush1.bf16.msra.mxu0 %v794
  %839 = vmatprep.subr.bf16.mxu0 %v798
  %840 = vmatpush1.bf16.msra.mxu0 %v797
  %841 = vmatprep.subr.bf16.mxu0 %v801
  %842 = vmatpush1.bf16.msra.mxu0 %v800
  %843 = vmatprep.subr.bf16.mxu0 0
  %844 = vmatpush1.bf16.msra.mxu0 0
  %845 = vmatprep.subr.bf16.mxu0 0
  %846 = vmatpush1.bf16.msra.mxu0 0
  %847 = vmatprep.subr.bf16.mxu0 0
  %848 = vmatpush1.bf16.msra.mxu0 0
  %849 = vmatprep.subr.bf16.mxu0 0
  %850 = vmatpush1.bf16.msra.mxu0 0
  %851 = vmatprep.subr.bf16.mxu0 0
  %852 = vmatpush1.bf16.msra.mxu0 0
  %853 = vmatprep.subr.bf16.mxu0 0
  %854 = vmatpush1.bf16.msra.mxu0 0
  %855 = vmatprep.subr.bf16.mxu0 0
  %856 = vmatpush1.bf16.msra.mxu0 0
  %857 = vmatprep.subr.bf16.mxu0 0
  %858 = vmatpush1.bf16.msra.mxu0 0
  %859 = vmatprep.mubr.bf16.mxu0 0
  %860 = vmatmul.mubr.bf16.gmra.mrb[0].mxu0 %v645
  %v861 = vpop.f32.mrb[0].mxu0
  %v862 = vadd.f32 0.0, %v861
  %v863 = vpop.f32.mrb[0].mxu0
  %v864 = vadd.f32 0.0, %v863
  %v865 = vpop.f32.mrb[0].mxu0
  %v866 = vadd.f32 0.0, %v865
  %v867 = vpop.f32.mrb[0].mxu0
  %v868 = vadd.f32 0.0, %v867
  %869 = vdwg.mxu0
  %870 = vmatprep.subr.bf16.mxu0 0
  %871 = vmatpush1.bf16.msra.mxu0 %v781
  %872 = vmatprep.subr.bf16.mxu0 0
  %873 = vmatpush1.bf16.msra.mxu0 %v784
  %874 = vmatprep.subr.bf16.mxu0 0
  %875 = vmatpush1.bf16.msra.mxu0 %v787
  %876 = vmatprep.subr.bf16.mxu0 0
  %877 = vmatpush1.bf16.msra.mxu0 %v790
  %878 = vmatprep.subr.bf16.mxu0 0
  %879 = vmatpush1.bf16.msra.mxu0 %v793
  %880 = vmatprep.subr.bf16.mxu0 0
  %881 = vmatpush1.bf16.msra.mxu0 %v796
  %882 = vmatprep.subr.bf16.mxu0 0
  %883 = vmatpush1.bf16.msra.mxu0 %v799
  %884 = vmatprep.subr.bf16.mxu0 0
  %885 = vmatpush1.bf16.msra.mxu0 %v802
  %886 = vmatprep.subr.bf16.mxu0 0
  %887 = vmatpush1.bf16.msra.mxu0 0
  %888 = vmatprep.subr.bf16.mxu0 0
  %889 = vmatpush1.bf16.msra.mxu0 0
  %890 = vmatprep.subr.bf16.mxu0 0
  %891 = vmatpush1.bf16.msra.mxu0 0
  %892 = vmatprep.subr.bf16.mxu0 0
  %893 = vmatpush1.bf16.msra.mxu0 0
  %894 = vmatprep.subr.bf16.mxu0 0
  %895 = vmatpush1.bf16.msra.mxu0 0
  %896 = vmatprep.subr.bf16.mxu0 0
  %897 = vmatpush1.bf16.msra.mxu0 0
  %898 = vmatprep.subr.bf16.mxu0 0
  %899 = vmatpush1.bf16.msra.mxu0 0
  %900 = vmatprep.subr.bf16.mxu0 0
  %901 = vmatpush1.bf16.msra.mxu0 0
  %902 = vmatprep.mubr.bf16.mxu0 0
  %903 = vmatmul.mubr.bf16.gmra.mrb[0].mxu0 %v645
  %v904 = vpop.f32.mrb[0].mxu0
  %v905 = vadd.f32 0.0, %v904
  %v906 = vpop.f32.mrb[0].mxu0
  %v907 = vpop.f32.mrb[0].mxu0
  %v908 = vadd.f32 0.0, %v907
  %v909 = vpop.f32.mrb[0].mxu0
  %910 = vdwg.mxu0
  %v911 = vadd.f32 %v661, %v862
  %v912 = vadd.f32 %v664, %v866
  %v913 = vxor.u32 %v911, 2147483648
  %v914 = vxor.u32 %v912, 2147483648
  %v915 = vmul.f32 %v913, 1.442695
  %v916 = vpow.pop %v915
  %v917 = vmul.f32 %v914, 1.442695
  %v918 = vpow.pop %v917
  %v919 = vadd.f32 %v916, 1.0
  %v920 = vadd.f32 %v918, 1.0
  %v921 = vrcp.pop %v919
  %v922 = vmul.f32 1.0, %v921
  %v923 = vrcp.pop %v920
  %v924 = vmul.f32 1.0, %v923
  %v925 = vadd.f32 %v662, %v864
  %v926 = vadd.f32 %v665, %v868
  %v927 = vxor.u32 %v925, 2147483648
  %v928 = vxor.u32 %v926, 2147483648
  %v929 = vmul.f32 %v927, 1.442695
  %v930 = vpow.pop %v929
  %v931 = vmul.f32 %v928, 1.442695
  %v932 = vpow.pop %v931
  %v933 = vadd.f32 %v930, 1.0
  %v934 = vadd.f32 %v932, 1.0
  %v935 = vrcp.pop %v933
  %v936 = vmul.f32 1.0, %v935
  %v937 = vrcp.pop %v934
  %v938 = vmul.f32 1.0, %v937
  %v939 = vadd.f32 %v905, %v33
  %v940 = vadd.f32 %v908, %v33
  %v941 = vmul.f32 %v922, %v939
  %v942 = vmul.f32 %v924, %v940
  %v943 = vadd.f32 %v663, %v941
  %v944 = vadd.f32 %v666, %v942
  %v945 = vtanh.pop %v943
  %v946 = vtanh.pop %v944
  %v947 = vsub.f32 1.0, %v936
  %v948 = vsub.f32 1.0, %v938
  %v949 = vmul.f32 %v947, %v945
  %v950 = vmul.f32 %v948, %v946
  %v951 = vmul.f32 %v936, %v643
  %v952 = vmul.f32 %v938, %v644
  %v953 = vadd.f32 %v949, %v951
  %v954 = vadd.f32 %v950, %v952
  %v955 = vpack.c.bf16 %v954, %v953
  %v957 = vunpack.c.l.b16 %v955
  %v958 = vunpack.c.h.b16 %v955
  %v959 = vpack.c.b16 %v957, %v957
  %v960 = vpack.c.b16 %v958, %v958
  %s963 = scalar_lea.vmem %s4, 16
  %964 = vst [vmem:[%s963] sm:$0xf] %v959
  %965 = vst [vmem:[%s963 + $0x4] sm:$0xf] %v960
  %s966 = scalar_lea.vmem %s0, 72
  %v967 = vld [vmem:[%s966] sm:$0xff]
  %v968 = vld [vmem:[%s966 + $0x8] sm:$0xf]
  %v969 = vld [vmem:[%s966 + $0xc] sm:$0xff]
  %v970 = vld [vmem:[%s966 + $0x14] sm:$0xf]
  %v971 = vunpack.c.l.bf16 %v967
  %v972 = vunpack.c.h.bf16 %v967
  %v973 = vunpack.c.l.bf16 %v968
  %v974 = vunpack.c.l.bf16 %v969
  %v975 = vunpack.c.h.bf16 %v969
  %v976 = vunpack.c.l.bf16 %v970
  %v977 = vld [vmem:[%s2] sm:$0xff]
  %v978 = vld [vmem:[%s2 + $0x8] sm:$0xf]
  %v979 = vld [vmem:[%s2 + $0xc] sm:$0xff]
  %v980 = vld [vmem:[%s2 + $0x14] sm:$0xf]
  %v981 = vld [vmem:[%s2 + $0x18] sm:$0xff]
  %v982 = vld [vmem:[%s2 + $0x20] sm:$0xf]
  %v983 = vld [vmem:[%s2 + $0x24] sm:$0xff]
  %v984 = vld [vmem:[%s2 + $0x2c] sm:$0xf]
  %v985 = vld [vmem:[%s2 + $0x30] sm:$0xff]
  %v986 = vld [vmem:[%s2 + $0x38] sm:$0xf]
  %v987 = vld [vmem:[%s2 + $0x3c] sm:$0xff]
  %v988 = vld [vmem:[%s2 + $0x44] sm:$0xf]
  %v989 = vld [vmem:[%s2 + $0x48] sm:$0xff]
  %v990 = vld [vmem:[%s2 + $0x50] sm:$0xf]
  %v991 = vld [vmem:[%s2 + $0x54] sm:$0xff]
  %v992 = vld [vmem:[%s2 + $0x5c] sm:$0xf]
  %v993 = vld [vmem:[%s2 + $0x60] sm:$0xff]
  %v994 = vld [vmem:[%s2 + $0x68] sm:$0xf]
  %v995 = vld [vmem:[%s2 + $0x6c] sm:$0xff]
  %v996 = vld [vmem:[%s2 + $0x74] sm:$0xf]
  %v997 = vld [vmem:[%s2 + $0x78] sm:$0xff]
  %v998 = vld [vmem:[%s2 + $0x80] sm:$0xf]
  %v999 = vld [vmem:[%s2 + $0x84] sm:$0xff]
  %v1000 = vld [vmem:[%s2 + $0x8c] sm:$0xf]
  %v1001 = vld [vmem:[%s2 + $0x90] sm:$0xff]
  %v1002 = vld [vmem:[%s2 + $0x98] sm:$0xf]
  %v1003 = vld [vmem:[%s2 + $0x9c] sm:$0xff]
  %v1004 = vld [vmem:[%s2 + $0xa4] sm:$0xf]
  %v1005 = vld [vmem:[%s2 + $0xa8] sm:$0xff]
  %v1006 = vld [vmem:[%s2 + $0xb0] sm:$0xf]
  %v1007 = vld [vmem:[%s2 + $0xb4] sm:$0xff]
  %v1008 = vld [vmem:[%s2 + $0xbc] sm:$0xf]
  %v1041 = vunpack.c.l.b16 %v977
  %v1042 = vunpack.c.h.b16 %v977
  %v1043 = vunpack.c.l.b16 %v978
  %v1044 = vunpack.c.l.b16 %v979
  %v1045 = vunpack.c.h.b16 %v979
  %v1046 = vunpack.c.l.b16 %v980
  %v1047 = vunpack.c.l.b16 %v981
  %v1048 = vunpack.c.h.b16 %v981
  %v1049 = vunpack.c.l.b16 %v982
  %v1050 = vunpack.c.l.b16 %v983
  %v1051 = vunpack.c.h.b16 %v983
  %v1052 = vunpack.c.l.b16 %v984
  %v1053 = vunpack.c.l.b16 %v985
  %v1054 = vunpack.c.h.b16 %v985
  %v1055 = vunpack.c.l.b16 %v986
  %v1056 = vunpack.c.l.b16 %v987
  %v1057 = vunpack.c.h.b16 %v987
  %v1058 = vunpack.c.l.b16 %v988
  %v1059 = vunpack.c.l.b16 %v989
  %v1060 = vunpack.c.h.b16 %v989
  %v1061 = vunpack.c.l.b16 %v990
  %v1062 = vunpack.c.l.b16 %v991
  %v1063 = vunpack.c.h.b16 %v991
  %v1064 = vunpack.c.l.b16 %v992
  %v1065 = vunpack.c.l.b16 %v993
  %v1066 = vunpack.c.h.b16 %v993
  %v1067 = vunpack.c.l.b16 %v994
  %v1068 = vunpack.c.l.b16 %v995
  %v1069 = vunpack.c.h.b16 %v995
  %v1070 = vunpack.c.l.b16 %v996
  %v1071 = vunpack.c.l.b16 %v997
  %v1072 = vunpack.c.h.b16 %v997
  %v1073 = vunpack.c.l.b16 %v998
  %v1074 = vunpack.c.l.b16 %v999
  %v1075 = vunpack.c.h.b16 %v999
  %v1076 = vunpack.c.l.b16 %v1000
  %v1077 = vunpack.c.l.b16 %v1001
  %v1078 = vunpack.c.h.b16 %v1001
  %v1079 = vunpack.c.l.b16 %v1002
  %v1080 = vunpack.c.l.b16 %v1003
  %v1081 = vunpack.c.h.b16 %v1003
  %v1082 = vunpack.c.l.b16 %v1004
  %v1083 = vunpack.c.l.b16 %v1005
  %v1084 = vunpack.c.h.b16 %v1005
  %v1085 = vunpack.c.l.b16 %v1006
  %v1086 = vunpack.c.l.b16 %v1007
  %v1087 = vunpack.c.h.b16 %v1007
  %v1088 = vunpack.c.l.b16 %v1008
  %v1089 = vpack.c.b16 %v1044, %v1041
  %v1090 = vpack.c.b16 %v1045, %v1042
  %v1091 = vpack.c.b16 %v1046, %v1043
  %v1092 = vpack.c.b16 %v1050, %v1047
  %v1093 = vpack.c.b16 %v1051, %v1048
  %v1094 = vpack.c.b16 %v1052, %v1049
  %v1095 = vpack.c.b16 %v1056, %v1053
  %v1096 = vpack.c.b16 %v1057, %v1054
  %v1097 = vpack.c.b16 %v1058, %v1055
  %v1098 = vpack.c.b16 %v1062, %v1059
  %v1099 = vpack.c.b16 %v1063, %v1060
  %v1100 = vpack.c.b16 %v1064, %v1061
  %v1101 = vpack.c.b16 %v1068, %v1065
  %v1102 = vpack.c.b16 %v1069, %v1066
  %v1103 = vpack.c.b16 %v1070, %v1067
  %v1104 = vpack.c.b16 %v1074, %v1071
  %v1105 = vpack.c.b16 %v1075, %v1072
  %v1106 = vpack.c.b16 %v1076, %v1073
  %v1107 = vpack.c.b16 %v1080, %v1077
  %v1108 = vpack.c.b16 %v1081, %v1078
  %v1109 = vpack.c.b16 %v1082, %v1079
  %v1110 = vpack.c.b16 %v1086, %v1083
  %v1111 = vpack.c.b16 %v1087, %v1084
  %v1112 = vpack.c.b16 %v1088, %v1085
  %1137 = vmatprep.subr.bf16.mxu0 %v1090
  %1138 = vmatpush1.bf16.msra.mxu0 %v1089
  %1139 = vmatprep.subr.bf16.mxu0 %v1093
  %1140 = vmatpush1.bf16.msra.mxu0 %v1092
  %1141 = vmatprep.subr.bf16.mxu0 %v1096
  %1142 = vmatpush1.bf16.msra.mxu0 %v1095
  %1143 = vmatprep.subr.bf16.mxu0 %v1099
  %1144 = vmatpush1.bf16.msra.mxu0 %v1098
  %1145 = vmatprep.subr.bf16.mxu0 %v1102
  %1146 = vmatpush1.bf16.msra.mxu0 %v1101
  %1147 = vmatprep.subr.bf16.mxu0 %v1105
  %1148 = vmatpush1.bf16.msra.mxu0 %v1104
  %1149 = vmatprep.subr.bf16.mxu0 %v1108
  %1150 = vmatpush1.bf16.msra.mxu0 %v1107
  %1151 = vmatprep.subr.bf16.mxu0 %v1111
  %1152 = vmatpush1.bf16.msra.mxu0 %v1110
  %1153 = vmatprep.subr.bf16.mxu0 0
  %1154 = vmatpush1.bf16.msra.mxu0 0
  %1155 = vmatprep.subr.bf16.mxu0 0
  %1156 = vmatpush1.bf16.msra.mxu0 0
  %1157 = vmatprep.subr.bf16.mxu0 0
  %1158 = vmatpush1.bf16.msra.mxu0 0
  %1159 = vmatprep.subr.bf16.mxu0 0
  %1160 = vmatpush1.bf16.msra.mxu0 0
  %1161 = vmatprep.subr.bf16.mxu0 0
  %1162 = vmatpush1.bf16.msra.mxu0 0
  %1163 = vmatprep.subr.bf16.mxu0 0
  %1164 = vmatpush1.bf16.msra.mxu0 0
  %1165 = vmatprep.subr.bf16.mxu0 0
  %1166 = vmatpush1.bf16.msra.mxu0 0
  %1167 = vmatprep.subr.bf16.mxu0 0
  %1168 = vmatpush1.bf16.msra.mxu0 0
  %1169 = vmatprep.mubr.bf16.mxu0 0
  %1170 = vmatmul.mubr.bf16.gmra.mrb[0].mxu0 %v955
  %v1171 = vpop.f32.mrb[0].mxu0
  %v1172 = vadd.f32 0.0, %v1171
  %v1173 = vpop.f32.mrb[0].mxu0
  %v1174 = vadd.f32 0.0, %v1173
  %v1175 = vpop.f32.mrb[0].mxu0
  %v1176 = vadd.f32 0.0, %v1175
  %v1177 = vpop.f32.mrb[0].mxu0
  %v1178 = vadd.f32 0.0, %v1177
  %1179 = vdwg.mxu0
  %1180 = vmatprep.subr.bf16.mxu0 0
  %1181 = vmatpush1.bf16.msra.mxu0 %v1091
  %1182 = vmatprep.subr.bf16.mxu0 0
  %1183 = vmatpush1.bf16.msra.mxu0 %v1094
  %1184 = vmatprep.subr.bf16.mxu0 0
  %1185 = vmatpush1.bf16.msra.mxu0 %v1097
  %1186 = vmatprep.subr.bf16.mxu0 0
  %1187 = vmatpush1.bf16.msra.mxu0 %v1100
  %1188 = vmatprep.subr.bf16.mxu0 0
  %1189 = vmatpush1.bf16.msra.mxu0 %v1103
  %1190 = vmatprep.subr.bf16.mxu0 0
  %1191 = vmatpush1.bf16.msra.mxu0 %v1106
  %1192 = vmatprep.subr.bf16.mxu0 0
  %1193 = vmatpush1.bf16.msra.mxu0 %v1109
  %1194 = vmatprep.subr.bf16.mxu0 0
  %1195 = vmatpush1.bf16.msra.mxu0 %v1112
  %1196 = vmatprep.subr.bf16.mxu0 0
  %1197 = vmatpush1.bf16.msra.mxu0 0
  %1198 = vmatprep.subr.bf16.mxu0 0
  %1199 = vmatpush1.bf16.msra.mxu0 0
  %1200 = vmatprep.subr.bf16.mxu0 0
  %1201 = vmatpush1.bf16.msra.mxu0 0
  %1202 = vmatprep.subr.bf16.mxu0 0
  %1203 = vmatpush1.bf16.msra.mxu0 0
  %1204 = vmatprep.subr.bf16.mxu0 0
  %1205 = vmatpush1.bf16.msra.mxu0 0
  %1206 = vmatprep.subr.bf16.mxu0 0
  %1207 = vmatpush1.bf16.msra.mxu0 0
  %1208 = vmatprep.subr.bf16.mxu0 0
  %1209 = vmatpush1.bf16.msra.mxu0 0
  %1210 = vmatprep.subr.bf16.mxu0 0
  %1211 = vmatpush1.bf16.msra.mxu0 0
  %1212 = vmatprep.mubr.bf16.mxu0 0
  %1213 = vmatmul.mubr.bf16.gmra.mrb[0].mxu0 %v955
  %v1214 = vpop.f32.mrb[0].mxu0
  %v1215 = vadd.f32 0.0, %v1214
  %v1216 = vpop.f32.mrb[0].mxu0
  %v1217 = vpop.f32.mrb[0].mxu0
  %v1218 = vadd.f32 0.0, %v1217
  %v1219 = vpop.f32.mrb[0].mxu0
  %1220 = vdwg.mxu0
  %v1221 = vadd.f32 %v971, %v1172
  %v1222 = vadd.f32 %v974, %v1176
  %v1223 = vxor.u32 %v1221, 2147483648
  %v1224 = vxor.u32 %v1222, 2147483648
  %v1225 = vmul.f32 %v1223, 1.442695
  %v1226 = vpow.pop %v1225
  %v1227 = vmul.f32 %v1224, 1.442695
  %v1228 = vpow.pop %v1227
  %v1229 = vadd.f32 %v1226, 1.0
  %v1230 = vadd.f32 %v1228, 1.0
  %v1231 = vrcp.pop %v1229
  %v1232 = vmul.f32 1.0, %v1231
  %v1233 = vrcp.pop %v1230
  %v1234 = vmul.f32 1.0, %v1233
  %v1235 = vadd.f32 %v972, %v1174
  %v1236 = vadd.f32 %v975, %v1178
  %v1237 = vxor.u32 %v1235, 2147483648
  %v1238 = vxor.u32 %v1236, 2147483648
  %v1239 = vmul.f32 %v1237, 1.442695
  %v1240 = vpow.pop %v1239
  %v1241 = vmul.f32 %v1238, 1.442695
  %v1242 = vpow.pop %v1241
  %v1243 = vadd.f32 %v1240, 1.0
  %v1244 = vadd.f32 %v1242, 1.0
  %v1245 = vrcp.pop %v1243
  %v1246 = vmul.f32 1.0, %v1245
  %v1247 = vrcp.pop %v1244
  %v1248 = vmul.f32 1.0, %v1247
  %v1249 = vadd.f32 %v1215, %v33
  %v1250 = vadd.f32 %v1218, %v33
  %v1251 = vmul.f32 %v1232, %v1249
  %v1252 = vmul.f32 %v1234, %v1250
  %v1253 = vadd.f32 %v973, %v1251
  %v1254 = vadd.f32 %v976, %v1252
  %v1255 = vtanh.pop %v1253
  %v1256 = vtanh.pop %v1254
  %v1257 = vsub.f32 1.0, %v1246
  %v1258 = vsub.f32 1.0, %v1248
  %v1259 = vmul.f32 %v1257, %v1255
  %v1260 = vmul.f32 %v1258, %v1256
  %v1261 = vmul.f32 %v1246, %v953
  %v1262 = vmul.f32 %v1248, %v954
  %v1263 = vadd.f32 %v1259, %v1261
  %v1264 = vadd.f32 %v1260, %v1262
  %v1265 = vpack.c.bf16 %v1264, %v1263
  %v1267 = vunpack.c.l.b16 %v1265
  %v1268 = vunpack.c.h.b16 %v1265
  %v1269 = vpack.c.b16 %v1267, %v1267
  %v1270 = vpack.c.b16 %v1268, %v1268
  %s1273 = scalar_lea.vmem %s4, 24
  %1274 = vst [vmem:[%s1273] sm:$0xf] %v1269
  %1275 = vst [vmem:[%s1273 + $0x4] sm:$0xf] %v1270
  %s1276 = scalar_lea.vmem %s0, 96
  %v1277 = vld [vmem:[%s1276] sm:$0xff]
  %v1278 = vld [vmem:[%s1276 + $0x8] sm:$0xf]
  %v1279 = vld [vmem:[%s1276 + $0xc] sm:$0xff]
  %v1280 = vld [vmem:[%s1276 + $0x14] sm:$0xf]
  %v1281 = vunpack.c.l.bf16 %v1277
  %v1282 = vunpack.c.h.bf16 %v1277
  %v1283 = vunpack.c.l.bf16 %v1278
  %v1284 = vunpack.c.l.bf16 %v1279
  %v1285 = vunpack.c.h.bf16 %v1279
  %v1286 = vunpack.c.l.bf16 %v1280
  %v1287 = vld [vmem:[%s2] sm:$0xff]
  %v1288 = vld [vmem:[%s2 + $0x8] sm:$0xf]
  %v1289 = vld [vmem:[%s2 + $0xc] sm:$0xff]
  %v1290 = vld [vmem:[%s2 + $0x14] sm:$0xf]
  %v1291 = vld [vmem:[%s2 + $0x18] sm:$0xff]
  %v1292 = vld [vmem:[%s2 + $0x20] sm:$0xf]
  %v1293 = vld [vmem:[%s2 + $0x24] sm:$0xff]
  %v1294 = vld [vmem:[%s2 + $0x2c] sm:$0xf]
  %v1295 = vld [vmem:[%s2 + $0x30] sm:$0xff]
  %v1296 = vld [vmem:[%s2 + $0x38] sm:$0xf]
  %v1297 = vld [vmem:[%s2 + $0x3c] sm:$0xff]
  %v1298 = vld [vmem:[%s2 + $0x44] sm:$0xf]
  %v1299 = vld [vmem:[%s2 + $0x48] sm:$0xff]
  %v1300 = vld [vmem:[%s2 + $0x50] sm:$0xf]
  %v1301 = vld [vmem:[%s2 + $0x54] sm:$0xff]
  %v1302 = vld [vmem:[%s2 + $0x5c] sm:$0xf]
  %v1303 = vld [vmem:[%s2 + $0x60] sm:$0xff]
  %v1304 = vld [vmem:[%s2 + $0x68] sm:$0xf]
  %v1305 = vld [vmem:[%s2 + $0x6c] sm:$0xff]
  %v1306 = vld [vmem:[%s2 + $0x74] sm:$0xf]
  %v1307 = vld [vmem:[%s2 + $0x78] sm:$0xff]
  %v1308 = vld [vmem:[%s2 + $0x80] sm:$0xf]
  %v1309 = vld [vmem:[%s2 + $0x84] sm:$0xff]
  %v1310 = vld [vmem:[%s2 + $0x8c] sm:$0xf]
  %v1311 = vld [vmem:[%s2 + $0x90] sm:$0xff]
  %v1312 = vld [vmem:[%s2 + $0x98] sm:$0xf]
  %v1313 = vld [vmem:[%s2 + $0x9c] sm:$0xff]
  %v1314 = vld [vmem:[%s2 + $0xa4] sm:$0xf]
  %v1315 = vld [vmem:[%s2 + $0xa8] sm:$0xff]
  %v1316 = vld [vmem:[%s2 + $0xb0] sm:$0xf]
  %v1317 = vld [vmem:[%s2 + $0xb4] sm:$0xff]
  %v1318 = vld [vmem:[%s2 + $0xbc] sm:$0xf]
  %v1351 = vunpack.c.l.b16 %v1287
  %v1352 = vunpack.c.h.b16 %v1287
  %v1353 = vunpack.c.l.b16 %v1288
  %v1354 = vunpack.c.l.b16 %v1289
  %v1355 = vunpack.c.h.b16 %v1289
  %v1356 = vunpack.c.l.b16 %v1290
  %v1357 = vunpack.c.l.b16 %v1291
  %v1358 = vunpack.c.h.b16 %v1291
  %v1359 = vunpack.c.l.b16 %v1292
  %v1360 = vunpack.c.l.b16 %v1293
  %v1361 = vunpack.c.h.b16 %v1293
  %v1362 = vunpack.c.l.b16 %v1294
  %v1363 = vunpack.c.l.b16 %v1295
  %v1364 = vunpack.c.h.b16 %v1295
  %v1365 = vunpack.c.l.b16 %v1296
  %v1366 = vunpack.c.l.b16 %v1297
  %v1367 = vunpack.c.h.b16 %v1297
  %v1368 = vunpack.c.l.b16 %v1298
  %v1369 = vunpack.c.l.b16 %v1299
  %v1370 = vunpack.c.h.b16 %v1299
  %v1371 = vunpack.c.l.b16 %v1300
  %v1372 = vunpack.c.l.b16 %v1301
  %v1373 = vunpack.c.h.b16 %v1301
  %v1374 = vunpack.c.l.b16 %v1302
  %v1375 = vunpack.c.l.b16 %v1303
  %v1376 = vunpack.c.h.b16 %v1303
  %v1377 = vunpack.c.l.b16 %v1304
  %v1378 = vunpack.c.l.b16 %v1305
  %v1379 = vunpack.c.h.b16 %v1305
  %v1380 = vunpack.c.l.b16 %v1306
  %v1381 = vunpack.c.l.b16 %v1307
  %v1382 = vunpack.c.h.b16 %v1307
  %v1383 = vunpack.c.l.b16 %v1308
  %v1384 = vunpack.c.l.b16 %v1309
  %v1385 = vunpack.c.h.b16 %v1309
  %v1386 = vunpack.c.l.b16 %v1310
  %v1387 = vunpack.c.l.b16 %v1311
  %v1388 = vunpack.c.h.b16 %v1311
  %v1389 = vunpack.c.l.b16 %v1312
  %v1390 = vunpack.c.l.b16 %v1313
  %v1391 = vunpack.c.h.b16 %v1313
  %v1392 = vunpack.c.l.b16 %v1314
  %v1393 = vunpack.c.l.b16 %v1315
  %v1394 = vunpack.c.h.b16 %v1315
  %v1395 = vunpack.c.l.b16 %v1316
  %v1396 = vunpack.c.l.b16 %v1317
  %v1397 = vunpack.c.h.b16 %v1317
  %v1398 = vunpack.c.l.b16 %v1318
  %v1399 = vpack.c.b16 %v1354, %v1351
  %v1400 = vpack.c.b16 %v1355, %v1352
  %v1401 = vpack.c.b16 %v1356, %v1353
  %v1402 = vpack.c.b16 %v1360, %v1357
  %v1403 = vpack.c.b16 %v1361, %v1358
  %v1404 = vpack.c.b16 %v1362, %v1359
  %v1405 = vpack.c.b16 %v1366, %v1363
  %v1406 = vpack.c.b16 %v1367, %v1364
  %v1407 = vpack.c.b16 %v1368, %v1365
  %v1408 = vpack.c.b16 %v1372, %v1369
  %v1409 = vpack.c.b16 %v1373, %v1370
  %v1410 = vpack.c.b16 %v1374, %v1371
  %v1411 = vpack.c.b16 %v1378, %v1375
  %v1412 = vpack.c.b16 %v1379, %v1376
  %v1413 = vpack.c.b16 %v1380, %v1377
  %v1414 = vpack.c.b16 %v1384, %v1381
  %v1415 = vpack.c.b16 %v1385, %v1382
  %v1416 = vpack.c.b16 %v1386, %v1383
  %v1417 = vpack.c.b16 %v1390, %v1387
  %v1418 = vpack.c.b16 %v1391, %v1388
  %v1419 = vpack.c.b16 %v1392, %v1389
  %v1420 = vpack.c.b16 %v1396, %v1393
  %v1421 = vpack.c.b16 %v1397, %v1394
  %v1422 = vpack.c.b16 %v1398, %v1395
  %1447 = vmatprep.subr.bf16.mxu0 %v1400
  %1448 = vmatpush1.bf16.msra.mxu0 %v1399
  %1449 = vmatprep.subr.bf16.mxu0 %v1403
  %1450 = vmatpush1.bf16.msra.mxu0 %v1402
  %1451 = vmatprep.subr.bf16.mxu0 %v1406
  %1452 = vmatpush1.bf16.msra.mxu0 %v1405
  %1453 = vmatprep.subr.bf16.mxu0 %v1409
  %1454 = vmatpush1.bf16.msra.mxu0 %v1408
  %1455 = vmatprep.subr.bf16.mxu0 %v1412
  %1456 = vmatpush1.bf16.msra.mxu0 %v1411
  %1457 = vmatprep.subr.bf16.mxu0 %v1415
  %1458 = vmatpush1.bf16.msra.mxu0 %v1414
  %1459 = vmatprep.subr.bf16.mxu0 %v1418
  %1460 = vmatpush1.bf16.msra.mxu0 %v1417
  %1461 = vmatprep.subr.bf16.mxu0 %v1421
  %1462 = vmatpush1.bf16.msra.mxu0 %v1420
  %1463 = vmatprep.subr.bf16.mxu0 0
  %1464 = vmatpush1.bf16.msra.mxu0 0
  %1465 = vmatprep.subr.bf16.mxu0 0
  %1466 = vmatpush1.bf16.msra.mxu0 0
  %1467 = vmatprep.subr.bf16.mxu0 0
  %1468 = vmatpush1.bf16.msra.mxu0 0
  %1469 = vmatprep.subr.bf16.mxu0 0
  %1470 = vmatpush1.bf16.msra.mxu0 0
  %1471 = vmatprep.subr.bf16.mxu0 0
  %1472 = vmatpush1.bf16.msra.mxu0 0
  %1473 = vmatprep.subr.bf16.mxu0 0
  %1474 = vmatpush1.bf16.msra.mxu0 0
  %1475 = vmatprep.subr.bf16.mxu0 0
  %1476 = vmatpush1.bf16.msra.mxu0 0
  %1477 = vmatprep.subr.bf16.mxu0 0
  %1478 = vmatpush1.bf16.msra.mxu0 0
  %1479 = vmatprep.mubr.bf16.mxu0 0
  %1480 = vmatmul.mubr.bf16.gmra.mrb[0].mxu0 %v1265
  %v1481 = vpop.f32.mrb[0].mxu0
  %v1482 = vadd.f32 0.0, %v1481
  %v1483 = vpop.f32.mrb[0].mxu0
  %v1484 = vadd.f32 0.0, %v1483
  %v1485 = vpop.f32.mrb[0].mxu0
  %v1486 = vadd.f32 0.0, %v1485
  %v1487 = vpop.f32.mrb[0].mxu0
  %v1488 = vadd.f32 0.0, %v1487
  %1489 = vdwg.mxu0
  %1490 = vmatprep.subr.bf16.mxu0 0
  %1491 = vmatpush1.bf16.msra.mxu0 %v1401
  %1492 = vmatprep.subr.bf16.mxu0 0
  %1493 = vmatpush1.bf16.msra.mxu0 %v1404
  %1494 = vmatprep.subr.bf16.mxu0 0
  %1495 = vmatpush1.bf16.msra.mxu0 %v1407
  %1496 = vmatprep.subr.bf16.mxu0 0
  %1497 = vmatpush1.bf16.msra.mxu0 %v1410
  %1498 = vmatprep.subr.bf16.mxu0 0
  %1499 = vmatpush1.bf16.msra.mxu0 %v1413
  %1500 = vmatprep.subr.bf16.mxu0 0
  %1501 = vmatpush1.bf16.msra.mxu0 %v1416
  %1502 = vmatprep.subr.bf16.mxu0 0
  %1503 = vmatpush1.bf16.msra.mxu0 %v1419
  %1504 = vmatprep.subr.bf16.mxu0 0
  %1505 = vmatpush1.bf16.msra.mxu0 %v1422
  %1506 = vmatprep.subr.bf16.mxu0 0
  %1507 = vmatpush1.bf16.msra.mxu0 0
  %1508 = vmatprep.subr.bf16.mxu0 0
  %1509 = vmatpush1.bf16.msra.mxu0 0
  %1510 = vmatprep.subr.bf16.mxu0 0
  %1511 = vmatpush1.bf16.msra.mxu0 0
  %1512 = vmatprep.subr.bf16.mxu0 0
  %1513 = vmatpush1.bf16.msra.mxu0 0
  %1514 = vmatprep.subr.bf16.mxu0 0
  %1515 = vmatpush1.bf16.msra.mxu0 0
  %1516 = vmatprep.subr.bf16.mxu0 0
  %1517 = vmatpush1.bf16.msra.mxu0 0
  %1518 = vmatprep.subr.bf16.mxu0 0
  %1519 = vmatpush1.bf16.msra.mxu0 0
  %1520 = vmatprep.subr.bf16.mxu0 0
  %1521 = vmatpush1.bf16.msra.mxu0 0
  %1522 = vmatprep.mubr.bf16.mxu0 0
  %1523 = vmatmul.mubr.bf16.gmra.mrb[0].mxu0 %v1265
  %v1524 = vpop.f32.mrb[0].mxu0
  %v1525 = vadd.f32 0.0, %v1524
  %v1526 = vpop.f32.mrb[0].mxu0
  %v1527 = vpop.f32.mrb[0].mxu0
  %v1528 = vadd.f32 0.0, %v1527
  %v1529 = vpop.f32.mrb[0].mxu0
  %1530 = vdwg.mxu0
  %v1531 = vadd.f32 %v1281, %v1482
  %v1532 = vadd.f32 %v1284, %v1486
  %v1533 = vxor.u32 %v1531, 2147483648
  %v1534 = vxor.u32 %v1532, 2147483648
  %v1535 = vmul.f32 %v1533, 1.442695
  %v1536 = vpow.pop %v1535
  %v1537 = vmul.f32 %v1534, 1.442695
  %v1538 = vpow.pop %v1537
  %v1539 = vadd.f32 %v1536, 1.0
  %v1540 = vadd.f32 %v1538, 1.0
  %v1541 = vrcp.pop %v1539
  %v1542 = vmul.f32 1.0, %v1541
  %v1543 = vrcp.pop %v1540
  %v1544 = vmul.f32 1.0, %v1543
  %v1545 = vadd.f32 %v1282, %v1484
  %v1546 = vadd.f32 %v1285, %v1488
  %v1547 = vxor.u32 %v1545, 2147483648
  %v1548 = vxor.u32 %v1546, 2147483648
  %v1549 = vmul.f32 %v1547, 1.442695
  %v1550 = vpow.pop %v1549
  %v1551 = vmul.f32 %v1548, 1.442695
  %v1552 = vpow.pop %v1551
  %v1553 = vadd.f32 %v1550, 1.0
  %v1554 = vadd.f32 %v1552, 1.0
  %v1555 = vrcp.pop %v1553
  %v1556 = vmul.f32 1.0, %v1555
  %v1557 = vrcp.pop %v1554
  %v1558 = vmul.f32 1.0, %v1557
  %v1559 = vadd.f32 %v1525, %v33
  %v1560 = vadd.f32 %v1528, %v33
  %v1561 = vmul.f32 %v1542, %v1559
  %v1562 = vmul.f32 %v1544, %v1560
  %v1563 = vadd.f32 %v1283, %v1561
  %v1564 = vadd.f32 %v1286, %v1562
  %v1565 = vtanh.pop %v1563
  %v1566 = vtanh.pop %v1564
  %v1567 = vsub.f32 1.0, %v1556
  %v1568 = vsub.f32 1.0, %v1558
  %v1569 = vmul.f32 %v1567, %v1565
  %v1570 = vmul.f32 %v1568, %v1566
  %v1571 = vmul.f32 %v1556, %v1263
  %v1572 = vmul.f32 %v1558, %v1264
  %v1573 = vadd.f32 %v1569, %v1571
  %v1574 = vadd.f32 %v1570, %v1572
  %v1575 = vpack.c.bf16 %v1574, %v1573
  %v1577 = vunpack.c.l.b16 %v1575
  %v1578 = vunpack.c.h.b16 %v1575
  %v1579 = vpack.c.b16 %v1577, %v1577
  %v1580 = vpack.c.b16 %v1578, %v1578
  %s1583 = scalar_lea.vmem %s4, 32
  %1584 = vst [vmem:[%s1583] sm:$0xf] %v1579
  %1585 = vst [vmem:[%s1583 + $0x4] sm:$0xf] %v1580
  %s1586 = scalar_lea.vmem %s0, 120
  %v1587 = vld [vmem:[%s1586] sm:$0xff]
  %v1588 = vld [vmem:[%s1586 + $0x8] sm:$0xf]
  %v1589 = vld [vmem:[%s1586 + $0xc] sm:$0xff]
  %v1590 = vld [vmem:[%s1586 + $0x14] sm:$0xf]
  %v1591 = vunpack.c.l.bf16 %v1587
  %v1592 = vunpack.c.h.bf16 %v1587
  %v1593 = vunpack.c.l.bf16 %v1588
  %v1594 = vunpack.c.l.bf16 %v1589
  %v1595 = vunpack.c.h.bf16 %v1589
  %v1596 = vunpack.c.l.bf16 %v1590
  %v1597 = vld [vmem:[%s2] sm:$0xff]
  %v1598 = vld [vmem:[%s2 + $0x8] sm:$0xf]
  %v1599 = vld [vmem:[%s2 + $0xc] sm:$0xff]
  %v1600 = vld [vmem:[%s2 + $0x14] sm:$0xf]
  %v1601 = vld [vmem:[%s2 + $0x18] sm:$0xff]
  %v1602 = vld [vmem:[%s2 + $0x20] sm:$0xf]
  %v1603 = vld [vmem:[%s2 + $0x24] sm:$0xff]
  %v1604 = vld [vmem:[%s2 + $0x2c] sm:$0xf]
  %v1605 = vld [vmem:[%s2 + $0x30] sm:$0xff]
  %v1606 = vld [vmem:[%s2 + $0x38] sm:$0xf]
  %v1607 = vld [vmem:[%s2 + $0x3c] sm:$0xff]
  %v1608 = vld [vmem:[%s2 + $0x44] sm:$0xf]
  %v1609 = vld [vmem:[%s2 + $0x48] sm:$0xff]
  %v1610 = vld [vmem:[%s2 + $0x50] sm:$0xf]
  %v1611 = vld [vmem:[%s2 + $0x54] sm:$0xff]
  %v1612 = vld [vmem:[%s2 + $0x5c] sm:$0xf]
  %v1613 = vld [vmem:[%s2 + $0x60] sm:$0xff]
  %v1614 = vld [vmem:[%s2 + $0x68] sm:$0xf]
  %v1615 = vld [vmem:[%s2 + $0x6c] sm:$0xff]
  %v1616 = vld [vmem:[%s2 + $0x74] sm:$0xf]
  %v1617 = vld [vmem:[%s2 + $0x78] sm:$0xff]
  %v1618 = vld [vmem:[%s2 + $0x80] sm:$0xf]
  %v1619 = vld [vmem:[%s2 + $0x84] sm:$0xff]
  %v1620 = vld [vmem:[%s2 + $0x8c] sm:$0xf]
  %v1621 = vld [vmem:[%s2 + $0x90] sm:$0xff]
  %v1622 = vld [vmem:[%s2 + $0x98] sm:$0xf]
  %v1623 = vld [vmem:[%s2 + $0x9c] sm:$0xff]
  %v1624 = vld [vmem:[%s2 + $0xa4] sm:$0xf]
  %v1625 = vld [vmem:[%s2 + $0xa8] sm:$0xff]
  %v1626 = vld [vmem:[%s2 + $0xb0] sm:$0xf]
  %v1627 = vld [vmem:[%s2 + $0xb4] sm:$0xff]
  %v1628 = vld [vmem:[%s2 + $0xbc] sm:$0xf]
  %v1661 = vunpack.c.l.b16 %v1597
  %v1662 = vunpack.c.h.b16 %v1597
  %v1663 = vunpack.c.l.b16 %v1598
  %v1664 = vunpack.c.l.b16 %v1599
  %v1665 = vunpack.c.h.b16 %v1599
  %v1666 = vunpack.c.l.b16 %v1600
  %v1667 = vunpack.c.l.b16 %v1601
  %v1668 = vunpack.c.h.b16 %v1601
  %v1669 = vunpack.c.l.b16 %v1602
  %v1670 = vunpack.c.l.b16 %v1603
  %v1671 = vunpack.c.h.b16 %v1603
  %v1672 = vunpack.c.l.b16 %v1604
  %v1673 = vunpack.c.l.b16 %v1605
  %v1674 = vunpack.c.h.b16 %v1605
  %v1675 = vunpack.c.l.b16 %v1606
  %v1676 = vunpack.c.l.b16 %v1607
  %v1677 = vunpack.c.h.b16 %v1607
  %v1678 = vunpack.c.l.b16 %v1608
  %v1679 = vunpack.c.l.b16 %v1609
  %v1680 = vunpack.c.h.b16 %v1609
  %v1681 = vunpack.c.l.b16 %v1610
  %v1682 = vunpack.c.l.b16 %v1611
  %v1683 = vunpack.c.h.b16 %v1611
  %v1684 = vunpack.c.l.b16 %v1612
  %v1685 = vunpack.c.l.b16 %v1613
  %v1686 = vunpack.c.h.b16 %v1613
  %v1687 = vunpack.c.l.b16 %v1614
  %v1688 = vunpack.c.l.b16 %v1615
  %v1689 = vunpack.c.h.b16 %v1615
  %v1690 = vunpack.c.l.b16 %v1616
  %v1691 = vunpack.c.l.b16 %v1617
  %v1692 = vunpack.c.h.b16 %v1617
  %v1693 = vunpack.c.l.b16 %v1618
  %v1694 = vunpack.c.l.b16 %v1619
  %v1695 = vunpack.c.h.b16 %v1619
  %v1696 = vunpack.c.l.b16 %v1620
  %v1697 = vunpack.c.l.b16 %v1621
  %v1698 = vunpack.c.h.b16 %v1621
  %v1699 = vunpack.c.l.b16 %v1622
  %v1700 = vunpack.c.l.b16 %v1623
  %v1701 = vunpack.c.h.b16 %v1623
  %v1702 = vunpack.c.l.b16 %v1624
  %v1703 = vunpack.c.l.b16 %v1625
  %v1704 = vunpack.c.h.b16 %v1625
  %v1705 = vunpack.c.l.b16 %v1626
  %v1706 = vunpack.c.l.b16 %v1627
  %v1707 = vunpack.c.h.b16 %v1627
  %v1708 = vunpack.c.l.b16 %v1628
  %v1709 = vpack.c.b16 %v1664, %v1661
  %v1710 = vpack.c.b16 %v1665, %v1662
  %v1711 = vpack.c.b16 %v1666, %v1663
  %v1712 = vpack.c.b16 %v1670, %v1667
  %v1713 = vpack.c.b16 %v1671, %v1668
  %v1714 = vpack.c.b16 %v1672, %v1669
  %v1715 = vpack.c.b16 %v1676, %v1673
  %v1716 = vpack.c.b16 %v1677, %v1674
  %v1717 = vpack.c.b16 %v1678, %v1675
  %v1718 = vpack.c.b16 %v1682, %v1679
  %v1719 = vpack.c.b16 %v1683, %v1680
  %v1720 = vpack.c.b16 %v1684, %v1681
  %v1721 = vpack.c.b16 %v1688, %v1685
  %v1722 = vpack.c.b16 %v1689, %v1686
  %v1723 = vpack.c.b16 %v1690, %v1687
  %v1724 = vpack.c.b16 %v1694, %v1691
  %v1725 = vpack.c.b16 %v1695, %v1692
  %v1726 = vpack.c.b16 %v1696, %v1693
  %v1727 = vpack.c.b16 %v1700, %v1697
  %v1728 = vpack.c.b16 %v1701, %v1698
  %v1729 = vpack.c.b16 %v1702, %v1699
  %v1730 = vpack.c.b16 %v1706, %v1703
  %v1731 = vpack.c.b16 %v1707, %v1704
  %v1732 = vpack.c.b16 %v1708, %v1705
  %1757 = vmatprep.subr.bf16.mxu0 %v1710
  %1758 = vmatpush1.bf16.msra.mxu0 %v1709
  %1759 = vmatprep.subr.bf16.mxu0 %v1713
  %1760 = vmatpush1.bf16.msra.mxu0 %v1712
  %1761 = vmatprep.subr.bf16.mxu0 %v1716
  %1762 = vmatpush1.bf16.msra.mxu0 %v1715
  %1763 = vmatprep.subr.bf16.mxu0 %v1719
  %1764 = vmatpush1.bf16.msra.mxu0 %v1718
  %1765 = vmatprep.subr.bf16.mxu0 %v1722
  %1766 = vmatpush1.bf16.msra.mxu0 %v1721
  %1767 = vmatprep.subr.bf16.mxu0 %v1725
  %1768 = vmatpush1.bf16.msra.mxu0 %v1724
  %1769 = vmatprep.subr.bf16.mxu0 %v1728
  %1770 = vmatpush1.bf16.msra.mxu0 %v1727
  %1771 = vmatprep.subr.bf16.mxu0 %v1731
  %1772 = vmatpush1.bf16.msra.mxu0 %v1730
  %1773 = vmatprep.subr.bf16.mxu0 0
  %1774 = vmatpush1.bf16.msra.mxu0 0
  %1775 = vmatprep.subr.bf16.mxu0 0
  %1776 = vmatpush1.bf16.msra.mxu0 0
  %1777 = vmatprep.subr.bf16.mxu0 0
  %1778 = vmatpush1.bf16.msra.mxu0 0
  %1779 = vmatprep.subr.bf16.mxu0 0
  %1780 = vmatpush1.bf16.msra.mxu0 0
  %1781 = vmatprep.subr.bf16.mxu0 0
  %1782 = vmatpush1.bf16.msra.mxu0 0
  %1783 = vmatprep.subr.bf16.mxu0 0
  %1784 = vmatpush1.bf16.msra.mxu0 0
  %1785 = vmatprep.subr.bf16.mxu0 0
  %1786 = vmatpush1.bf16.msra.mxu0 0
  %1787 = vmatprep.subr.bf16.mxu0 0
  %1788 = vmatpush1.bf16.msra.mxu0 0
  %1789 = vmatprep.mubr.bf16.mxu0 0
  %1790 = vmatmul.mubr.bf16.gmra.mrb[0].mxu0 %v1575
  %v1791 = vpop.f32.mrb[0].mxu0
  %v1792 = vadd.f32 0.0, %v1791
  %v1793 = vpop.f32.mrb[0].mxu0
  %v1794 = vadd.f32 0.0, %v1793
  %v1795 = vpop.f32.mrb[0].mxu0
  %v1796 = vadd.f32 0.0, %v1795
  %v1797 = vpop.f32.mrb[0].mxu0
  %v1798 = vadd.f32 0.0, %v1797
  %1799 = vdwg.mxu0
  %1800 = vmatprep.subr.bf16.mxu0 0
  %1801 = vmatpush1.bf16.msra.mxu0 %v1711
  %1802 = vmatprep.subr.bf16.mxu0 0
  %1803 = vmatpush1.bf16.msra.mxu0 %v1714
  %1804 = vmatprep.subr.bf16.mxu0 0
  %1805 = vmatpush1.bf16.msra.mxu0 %v1717
  %1806 = vmatprep.subr.bf16.mxu0 0
  %1807 = vmatpush1.bf16.msra.mxu0 %v1720
  %1808 = vmatprep.subr.bf16.mxu0 0
  %1809 = vmatpush1.bf16.msra.mxu0 %v1723
  %1810 = vmatprep.subr.bf16.mxu0 0
  %1811 = vmatpush1.bf16.msra.mxu0 %v1726
  %1812 = vmatprep.subr.bf16.mxu0 0
  %1813 = vmatpush1.bf16.msra.mxu0 %v1729
  %1814 = vmatprep.subr.bf16.mxu0 0
  %1815 = vmatpush1.bf16.msra.mxu0 %v1732
  %1816 = vmatprep.subr.bf16.mxu0 0
  %1817 = vmatpush1.bf16.msra.mxu0 0
  %1818 = vmatprep.subr.bf16.mxu0 0
  %1819 = vmatpush1.bf16.msra.mxu0 0
  %1820 = vmatprep.subr.bf16.mxu0 0
  %1821 = vmatpush1.bf16.msra.mxu0 0
  %1822 = vmatprep.subr.bf16.mxu0 0
  %1823 = vmatpush1.bf16.msra.mxu0 0
  %1824 = vmatprep.subr.bf16.mxu0 0
  %1825 = vmatpush1.bf16.msra.mxu0 0
  %1826 = vmatprep.subr.bf16.mxu0 0
  %1827 = vmatpush1.bf16.msra.mxu0 0
  %1828 = vmatprep.subr.bf16.mxu0 0
  %1829 = vmatpush1.bf16.msra.mxu0 0
  %1830 = vmatprep.subr.bf16.mxu0 0
  %1831 = vmatpush1.bf16.msra.mxu0 0
  %1832 = vmatprep.mubr.bf16.mxu0 0
  %1833 = vmatmul.mubr.bf16.gmra.mrb[0].mxu0 %v1575
  %v1834 = vpop.f32.mrb[0].mxu0
  %v1835 = vadd.f32 0.0, %v1834
  %v1836 = vpop.f32.mrb[0].mxu0
  %v1837 = vpop.f32.mrb[0].mxu0
  %v1838 = vadd.f32 0.0, %v1837
  %v1839 = vpop.f32.mrb[0].mxu0
  %1840 = vdwg.mxu0
  %v1841 = vadd.f32 %v1591, %v1792
  %v1842 = vadd.f32 %v1594, %v1796
  %v1843 = vxor.u32 %v1841, 2147483648
  %v1844 = vxor.u32 %v1842, 2147483648
  %v1845 = vmul.f32 %v1843, 1.442695
  %v1846 = vpow.pop %v1845
  %v1847 = vmul.f32 %v1844, 1.442695
  %v1848 = vpow.pop %v1847
  %v1849 = vadd.f32 %v1846, 1.0
  %v1850 = vadd.f32 %v1848, 1.0
  %v1851 = vrcp.pop %v1849
  %v1852 = vmul.f32 1.0, %v1851
  %v1853 = vrcp.pop %v1850
  %v1854 = vmul.f32 1.0, %v1853
  %v1855 = vadd.f32 %v1592, %v1794
  %v1856 = vadd.f32 %v1595, %v1798
  %v1857 = vxor.u32 %v1855, 2147483648
  %v1858 = vxor.u32 %v1856, 2147483648
  %v1859 = vmul.f32 %v1857, 1.442695
  %v1860 = vpow.pop %v1859
  %v1861 = vmul.f32 %v1858, 1.442695
  %v1862 = vpow.pop %v1861
  %v1863 = vadd.f32 %v1860, 1.0
  %v1864 = vadd.f32 %v1862, 1.0
  %v1865 = vrcp.pop %v1863
  %v1866 = vmul.f32 1.0, %v1865
  %v1867 = vrcp.pop %v1864
  %v1868 = vmul.f32 1.0, %v1867
  %v1869 = vadd.f32 %v1835, %v33
  %v1870 = vadd.f32 %v1838, %v33
  %v1871 = vmul.f32 %v1852, %v1869
  %v1872 = vmul.f32 %v1854, %v1870
  %v1873 = vadd.f32 %v1593, %v1871
  %v1874 = vadd.f32 %v1596, %v1872
  %v1875 = vtanh.pop %v1873
  %v1876 = vtanh.pop %v1874
  %v1877 = vsub.f32 1.0, %v1866
  %v1878 = vsub.f32 1.0, %v1868
  %v1879 = vmul.f32 %v1877, %v1875
  %v1880 = vmul.f32 %v1878, %v1876
  %v1881 = vmul.f32 %v1866, %v1573
  %v1882 = vmul.f32 %v1868, %v1574
  %v1883 = vadd.f32 %v1879, %v1881
  %v1884 = vadd.f32 %v1880, %v1882
  %v1885 = vpack.c.bf16 %v1884, %v1883
  %v1887 = vunpack.c.l.b16 %v1885
  %v1888 = vunpack.c.h.b16 %v1885
  %v1889 = vpack.c.b16 %v1887, %v1887
  %v1890 = vpack.c.b16 %v1888, %v1888
  %s1893 = scalar_lea.vmem %s4, 40
  %1894 = vst [vmem:[%s1893] sm:$0xf] %v1889
  %1895 = vst [vmem:[%s1893 + $0x4] sm:$0xf] %v1890
  %s1896 = scalar_lea.vmem %s0, 144
  %v1897 = vld [vmem:[%s1896] sm:$0xff]
  %v1898 = vld [vmem:[%s1896 + $0x8] sm:$0xf]
  %v1899 = vld [vmem:[%s1896 + $0xc] sm:$0xff]
  %v1900 = vld [vmem:[%s1896 + $0x14] sm:$0xf]
  %v1901 = vunpack.c.l.bf16 %v1897
  %v1902 = vunpack.c.h.bf16 %v1897
  %v1903 = vunpack.c.l.bf16 %v1898
  %v1904 = vunpack.c.l.bf16 %v1899
  %v1905 = vunpack.c.h.bf16 %v1899
  %v1906 = vunpack.c.l.bf16 %v1900
  %v1907 = vld [vmem:[%s2] sm:$0xff]
  %v1908 = vld [vmem:[%s2 + $0x8] sm:$0xf]
  %v1909 = vld [vmem:[%s2 + $0xc] sm:$0xff]
  %v1910 = vld [vmem:[%s2 + $0x14] sm:$0xf]
  %v1911 = vld [vmem:[%s2 + $0x18] sm:$0xff]
  %v1912 = vld [vmem:[%s2 + $0x20] sm:$0xf]
  %v1913 = vld [vmem:[%s2 + $0x24] sm:$0xff]
  %v1914 = vld [vmem:[%s2 + $0x2c] sm:$0xf]
  %v1915 = vld [vmem:[%s2 + $0x30] sm:$0xff]
  %v1916 = vld [vmem:[%s2 + $0x38] sm:$0xf]
  %v1917 = vld [vmem:[%s2 + $0x3c] sm:$0xff]
  %v1918 = vld [vmem:[%s2 + $0x44] sm:$0xf]
  %v1919 = vld [vmem:[%s2 + $0x48] sm:$0xff]
  %v1920 = vld [vmem:[%s2 + $0x50] sm:$0xf]
  %v1921 = vld [vmem:[%s2 + $0x54] sm:$0xff]
  %v1922 = vld [vmem:[%s2 + $0x5c] sm:$0xf]
  %v1923 = vld [vmem:[%s2 + $0x60] sm:$0xff]
  %v1924 = vld [vmem:[%s2 + $0x68] sm:$0xf]
  %v1925 = vld [vmem:[%s2 + $0x6c] sm:$0xff]
  %v1926 = vld [vmem:[%s2 + $0x74] sm:$0xf]
  %v1927 = vld [vmem:[%s2 + $0x78] sm:$0xff]
  %v1928 = vld [vmem:[%s2 + $0x80] sm:$0xf]
  %v1929 = vld [vmem:[%s2 + $0x84] sm:$0xff]
  %v1930 = vld [vmem:[%s2 + $0x8c] sm:$0xf]
  %v1931 = vld [vmem:[%s2 + $0x90] sm:$0xff]
  %v1932 = vld [vmem:[%s2 + $0x98] sm:$0xf]
  %v1933 = vld [vmem:[%s2 + $0x9c] sm:$0xff]
  %v1934 = vld [vmem:[%s2 + $0xa4] sm:$0xf]
  %v1935 = vld [vmem:[%s2 + $0xa8] sm:$0xff]
  %v1936 = vld [vmem:[%s2 + $0xb0] sm:$0xf]
  %v1937 = vld [vmem:[%s2 + $0xb4] sm:$0xff]
  %v1938 = vld [vmem:[%s2 + $0xbc] sm:$0xf]
  %v1971 = vunpack.c.l.b16 %v1907
  %v1972 = vunpack.c.h.b16 %v1907
  %v1973 = vunpack.c.l.b16 %v1908
  %v1974 = vunpack.c.l.b16 %v1909
  %v1975 = vunpack.c.h.b16 %v1909
  %v1976 = vunpack.c.l.b16 %v1910
  %v1977 = vunpack.c.l.b16 %v1911
  %v1978 = vunpack.c.h.b16 %v1911
  %v1979 = vunpack.c.l.b16 %v1912
  %v1980 = vunpack.c.l.b16 %v1913
  %v1981 = vunpack.c.h.b16 %v1913
  %v1982 = vunpack.c.l.b16 %v1914
  %v1983 = vunpack.c.l.b16 %v1915
  %v1984 = vunpack.c.h.b16 %v1915
  %v1985 = vunpack.c.l.b16 %v1916
  %v1986 = vunpack.c.l.b16 %v1917
  %v1987 = vunpack.c.h.b16 %v1917
  %v1988 = vunpack.c.l.b16 %v1918
  %v1989 = vunpack.c.l.b16 %v1919
  %v1990 = vunpack.c.h.b16 %v1919
  %v1991 = vunpack.c.l.b16 %v1920
  %v1992 = vunpack.c.l.b16 %v1921
  %v1993 = vunpack.c.h.b16 %v1921
  %v1994 = vunpack.c.l.b16 %v1922
  %v1995 = vunpack.c.l.b16 %v1923
  %v1996 = vunpack.c.h.b16 %v1923
  %v1997 = vunpack.c.l.b16 %v1924
  %v1998 = vunpack.c.l.b16 %v1925
  %v1999 = vunpack.c.h.b16 %v1925
  %v2000 = vunpack.c.l.b16 %v1926
  %v2001 = vunpack.c.l.b16 %v1927
  %v2002 = vunpack.c.h.b16 %v1927
  %v2003 = vunpack.c.l.b16 %v1928
  %v2004 = vunpack.c.l.b16 %v1929
  %v2005 = vunpack.c.h.b16 %v1929
  %v2006 = vunpack.c.l.b16 %v1930
  %v2007 = vunpack.c.l.b16 %v1931
  %v2008 = vunpack.c.h.b16 %v1931
  %v2009 = vunpack.c.l.b16 %v1932
  %v2010 = vunpack.c.l.b16 %v1933
  %v2011 = vunpack.c.h.b16 %v1933
  %v2012 = vunpack.c.l.b16 %v1934
  %v2013 = vunpack.c.l.b16 %v1935
  %v2014 = vunpack.c.h.b16 %v1935
  %v2015 = vunpack.c.l.b16 %v1936
  %v2016 = vunpack.c.l.b16 %v1937
  %v2017 = vunpack.c.h.b16 %v1937
  %v2018 = vunpack.c.l.b16 %v1938
  %v2019 = vpack.c.b16 %v1974, %v1971
  %v2020 = vpack.c.b16 %v1975, %v1972
  %v2021 = vpack.c.b16 %v1976, %v1973
  %v2022 = vpack.c.b16 %v1980, %v1977
  %v2023 = vpack.c.b16 %v1981, %v1978
  %v2024 = vpack.c.b16 %v1982, %v1979
  %v2025 = vpack.c.b16 %v1986, %v1983
  %v2026 = vpack.c.b16 %v1987, %v1984
  %v2027 = vpack.c.b16 %v1988, %v1985
  %v2028 = vpack.c.b16 %v1992, %v1989
  %v2029 = vpack.c.b16 %v1993, %v1990
  %v2030 = vpack.c.b16 %v1994, %v1991
  %v2031 = vpack.c.b16 %v1998, %v1995
  %v2032 = vpack.c.b16 %v1999, %v1996
  %v2033 = vpack.c.b16 %v2000, %v1997
  %v2034 = vpack.c.b16 %v2004, %v2001
  %v2035 = vpack.c.b16 %v2005, %v2002
  %v2036 = vpack.c.b16 %v2006, %v2003
  %v2037 = vpack.c.b16 %v2010, %v2007
  %v2038 = vpack.c.b16 %v2011, %v2008
  %v2039 = vpack.c.b16 %v2012, %v2009
  %v2040 = vpack.c.b16 %v2016, %v2013
  %v2041 = vpack.c.b16 %v2017, %v2014
  %v2042 = vpack.c.b16 %v2018, %v2015
  %2067 = vmatprep.subr.bf16.mxu0 %v2020
  %2068 = vmatpush1.bf16.msra.mxu0 %v2019
  %2069 = vmatprep.subr.bf16.mxu0 %v2023
  %2070 = vmatpush1.bf16.msra.mxu0 %v2022
  %2071 = vmatprep.subr.bf16.mxu0 %v2026
  %2072 = vmatpush1.bf16.msra.mxu0 %v2025
  %2073 = vmatprep.subr.bf16.mxu0 %v2029
  %2074 = vmatpush1.bf16.msra.mxu0 %v2028
  %2075 = vmatprep.subr.bf16.mxu0 %v2032
  %2076 = vmatpush1.bf16.msra.mxu0 %v2031
  %2077 = vmatprep.subr.bf16.mxu0 %v2035
  %2078 = vmatpush1.bf16.msra.mxu0 %v2034
  %2079 = vmatprep.subr.bf16.mxu0 %v2038
  %2080 = vmatpush1.bf16.msra.mxu0 %v2037
  %2081 = vmatprep.subr.bf16.mxu0 %v2041
  %2082 = vmatpush1.bf16.msra.mxu0 %v2040
  %2083 = vmatprep.subr.bf16.mxu0 0
  %2084 = vmatpush1.bf16.msra.mxu0 0
  %2085 = vmatprep.subr.bf16.mxu0 0
  %2086 = vmatpush1.bf16.msra.mxu0 0
  %2087 = vmatprep.subr.bf16.mxu0 0
  %2088 = vmatpush1.bf16.msra.mxu0 0
  %2089 = vmatprep.subr.bf16.mxu0 0
  %2090 = vmatpush1.bf16.msra.mxu0 0
  %2091 = vmatprep.subr.bf16.mxu0 0
  %2092 = vmatpush1.bf16.msra.mxu0 0
  %2093 = vmatprep.subr.bf16.mxu0 0
  %2094 = vmatpush1.bf16.msra.mxu0 0
  %2095 = vmatprep.subr.bf16.mxu0 0
  %2096 = vmatpush1.bf16.msra.mxu0 0
  %2097 = vmatprep.subr.bf16.mxu0 0
  %2098 = vmatpush1.bf16.msra.mxu0 0
  %2099 = vmatprep.mubr.bf16.mxu0 0
  %2100 = vmatmul.mubr.bf16.gmra.mrb[0].mxu0 %v1885
  %v2101 = vpop.f32.mrb[0].mxu0
  %v2102 = vadd.f32 0.0, %v2101
  %v2103 = vpop.f32.mrb[0].mxu0
  %v2104 = vadd.f32 0.0, %v2103
  %v2105 = vpop.f32.mrb[0].mxu0
  %v2106 = vadd.f32 0.0, %v2105
  %v2107 = vpop.f32.mrb[0].mxu0
  %v2108 = vadd.f32 0.0, %v2107
  %2109 = vdwg.mxu0
  %2110 = vmatprep.subr.bf16.mxu0 0
  %2111 = vmatpush1.bf16.msra.mxu0 %v2021
  %2112 = vmatprep.subr.bf16.mxu0 0
  %2113 = vmatpush1.bf16.msra.mxu0 %v2024
  %2114 = vmatprep.subr.bf16.mxu0 0
  %2115 = vmatpush1.bf16.msra.mxu0 %v2027
  %2116 = vmatprep.subr.bf16.mxu0 0
  %2117 = vmatpush1.bf16.msra.mxu0 %v2030
  %2118 = vmatprep.subr.bf16.mxu0 0
  %2119 = vmatpush1.bf16.msra.mxu0 %v2033
  %2120 = vmatprep.subr.bf16.mxu0 0
  %2121 = vmatpush1.bf16.msra.mxu0 %v2036
  %2122 = vmatprep.subr.bf16.mxu0 0
  %2123 = vmatpush1.bf16.msra.mxu0 %v2039
  %2124 = vmatprep.subr.bf16.mxu0 0
  %2125 = vmatpush1.bf16.msra.mxu0 %v2042
  %2126 = vmatprep.subr.bf16.mxu0 0
  %2127 = vmatpush1.bf16.msra.mxu0 0
  %2128 = vmatprep.subr.bf16.mxu0 0
  %2129 = vmatpush1.bf16.msra.mxu0 0
  %2130 = vmatprep.subr.bf16.mxu0 0
  %2131 = vmatpush1.bf16.msra.mxu0 0
  %2132 = vmatprep.subr.bf16.mxu0 0
  %2133 = vmatpush1.bf16.msra.mxu0 0
  %2134 = vmatprep.subr.bf16.mxu0 0
  %2135 = vmatpush1.bf16.msra.mxu0 0
  %2136 = vmatprep.subr.bf16.mxu0 0
  %2137 = vmatpush1.bf16.msra.mxu0 0
  %2138 = vmatprep.subr.bf16.mxu0 0
  %2139 = vmatpush1.bf16.msra.mxu0 0
  %2140 = vmatprep.subr.bf16.mxu0 0
  %2141 = vmatpush1.bf16.msra.mxu0 0
  %2142 = vmatprep.mubr.bf16.mxu0 0
  %2143 = vmatmul.mubr.bf16.gmra.mrb[0].mxu0 %v1885
  %v2144 = vpop.f32.mrb[0].mxu0
  %v2145 = vadd.f32 0.0, %v2144
  %v2146 = vpop.f32.mrb[0].mxu0
  %v2147 = vpop.f32.mrb[0].mxu0
  %v2148 = vadd.f32 0.0, %v2147
  %v2149 = vpop.f32.mrb[0].mxu0
  %2150 = vdwg.mxu0
  %v2151 = vadd.f32 %v1901, %v2102
  %v2152 = vadd.f32 %v1904, %v2106
  %v2153 = vxor.u32 %v2151, 2147483648
  %v2154 = vxor.u32 %v2152, 2147483648
  %v2155 = vmul.f32 %v2153, 1.442695
  %v2156 = vpow.pop %v2155
  %v2157 = vmul.f32 %v2154, 1.442695
  %v2158 = vpow.pop %v2157
  %v2159 = vadd.f32 %v2156, 1.0
  %v2160 = vadd.f32 %v2158, 1.0
  %v2161 = vrcp.pop %v2159
  %v2162 = vmul.f32 1.0, %v2161
  %v2163 = vrcp.pop %v2160
  %v2164 = vmul.f32 1.0, %v2163
  %v2165 = vadd.f32 %v1902, %v2104
  %v2166 = vadd.f32 %v1905, %v2108
  %v2167 = vxor.u32 %v2165, 2147483648
  %v2168 = vxor.u32 %v2166, 2147483648
  %v2169 = vmul.f32 %v2167, 1.442695
  %v2170 = vpow.pop %v2169
  %v2171 = vmul.f32 %v2168, 1.442695
  %v2172 = vpow.pop %v2171
  %v2173 = vadd.f32 %v2170, 1.0
  %v2174 = vadd.f32 %v2172, 1.0
  %v2175 = vrcp.pop %v2173
  %v2176 = vmul.f32 1.0, %v2175
  %v2177 = vrcp.pop %v2174
  %v2178 = vmul.f32 1.0, %v2177
  %v2179 = vadd.f32 %v2145, %v33
  %v2180 = vadd.f32 %v2148, %v33
  %v2181 = vmul.f32 %v2162, %v2179
  %v2182 = vmul.f32 %v2164, %v2180
  %v2183 = vadd.f32 %v1903, %v2181
  %v2184 = vadd.f32 %v1906, %v2182
  %v2185 = vtanh.pop %v2183
  %v2186 = vtanh.pop %v2184
  %v2187 = vsub.f32 1.0, %v2176
  %v2188 = vsub.f32 1.0, %v2178
  %v2189 = vmul.f32 %v2187, %v2185
  %v2190 = vmul.f32 %v2188, %v2186
  %v2191 = vmul.f32 %v2176, %v1883
  %v2192 = vmul.f32 %v2178, %v1884
  %v2193 = vadd.f32 %v2189, %v2191
  %v2194 = vadd.f32 %v2190, %v2192
  %v2195 = vpack.c.bf16 %v2194, %v2193
  %v2197 = vunpack.c.l.b16 %v2195
  %v2198 = vunpack.c.h.b16 %v2195
  %v2199 = vpack.c.b16 %v2197, %v2197
  %v2200 = vpack.c.b16 %v2198, %v2198
  %s2203 = scalar_lea.vmem %s4, 48
  %2204 = vst [vmem:[%s2203] sm:$0xf] %v2199
  %2205 = vst [vmem:[%s2203 + $0x4] sm:$0xf] %v2200
  %s2206 = scalar_lea.vmem %s0, 168
  %v2207 = vld [vmem:[%s2206] sm:$0xff]
  %v2208 = vld [vmem:[%s2206 + $0x8] sm:$0xf]
  %v2209 = vld [vmem:[%s2206 + $0xc] sm:$0xff]
  %v2210 = vld [vmem:[%s2206 + $0x14] sm:$0xf]
  %v2211 = vunpack.c.l.bf16 %v2207
  %v2212 = vunpack.c.h.bf16 %v2207
  %v2213 = vunpack.c.l.bf16 %v2208
  %v2214 = vunpack.c.l.bf16 %v2209
  %v2215 = vunpack.c.h.bf16 %v2209
  %v2216 = vunpack.c.l.bf16 %v2210
  %v2217 = vld [vmem:[%s2] sm:$0xff]
  %v2218 = vld [vmem:[%s2 + $0x8] sm:$0xf]
  %v2219 = vld [vmem:[%s2 + $0xc] sm:$0xff]
  %v2220 = vld [vmem:[%s2 + $0x14] sm:$0xf]
  %v2221 = vld [vmem:[%s2 + $0x18] sm:$0xff]
  %v2222 = vld [vmem:[%s2 + $0x20] sm:$0xf]
  %v2223 = vld [vmem:[%s2 + $0x24] sm:$0xff]
  %v2224 = vld [vmem:[%s2 + $0x2c] sm:$0xf]
  %v2225 = vld [vmem:[%s2 + $0x30] sm:$0xff]
  %v2226 = vld [vmem:[%s2 + $0x38] sm:$0xf]
  %v2227 = vld [vmem:[%s2 + $0x3c] sm:$0xff]
  %v2228 = vld [vmem:[%s2 + $0x44] sm:$0xf]
  %v2229 = vld [vmem:[%s2 + $0x48] sm:$0xff]
  %v2230 = vld [vmem:[%s2 + $0x50] sm:$0xf]
  %v2231 = vld [vmem:[%s2 + $0x54] sm:$0xff]
  %v2232 = vld [vmem:[%s2 + $0x5c] sm:$0xf]
  %v2233 = vld [vmem:[%s2 + $0x60] sm:$0xff]
  %v2234 = vld [vmem:[%s2 + $0x68] sm:$0xf]
  %v2235 = vld [vmem:[%s2 + $0x6c] sm:$0xff]
  %v2236 = vld [vmem:[%s2 + $0x74] sm:$0xf]
  %v2237 = vld [vmem:[%s2 + $0x78] sm:$0xff]
  %v2238 = vld [vmem:[%s2 + $0x80] sm:$0xf]
  %v2239 = vld [vmem:[%s2 + $0x84] sm:$0xff]
  %v2240 = vld [vmem:[%s2 + $0x8c] sm:$0xf]
  %v2241 = vld [vmem:[%s2 + $0x90] sm:$0xff]
  %v2242 = vld [vmem:[%s2 + $0x98] sm:$0xf]
  %v2243 = vld [vmem:[%s2 + $0x9c] sm:$0xff]
  %v2244 = vld [vmem:[%s2 + $0xa4] sm:$0xf]
  %v2245 = vld [vmem:[%s2 + $0xa8] sm:$0xff]
  %v2246 = vld [vmem:[%s2 + $0xb0] sm:$0xf]
  %v2247 = vld [vmem:[%s2 + $0xb4] sm:$0xff]
  %v2248 = vld [vmem:[%s2 + $0xbc] sm:$0xf]
  %v2281 = vunpack.c.l.b16 %v2217
  %v2282 = vunpack.c.h.b16 %v2217
  %v2283 = vunpack.c.l.b16 %v2218
  %v2284 = vunpack.c.l.b16 %v2219
  %v2285 = vunpack.c.h.b16 %v2219
  %v2286 = vunpack.c.l.b16 %v2220
  %v2287 = vunpack.c.l.b16 %v2221
  %v2288 = vunpack.c.h.b16 %v2221
  %v2289 = vunpack.c.l.b16 %v2222
  %v2290 = vunpack.c.l.b16 %v2223
  %v2291 = vunpack.c.h.b16 %v2223
  %v2292 = vunpack.c.l.b16 %v2224
  %v2293 = vunpack.c.l.b16 %v2225
  %v2294 = vunpack.c.h.b16 %v2225
  %v2295 = vunpack.c.l.b16 %v2226
  %v2296 = vunpack.c.l.b16 %v2227
  %v2297 = vunpack.c.h.b16 %v2227
  %v2298 = vunpack.c.l.b16 %v2228
  %v2299 = vunpack.c.l.b16 %v2229
  %v2300 = vunpack.c.h.b16 %v2229
  %v2301 = vunpack.c.l.b16 %v2230
  %v2302 = vunpack.c.l.b16 %v2231
  %v2303 = vunpack.c.h.b16 %v2231
  %v2304 = vunpack.c.l.b16 %v2232
  %v2305 = vunpack.c.l.b16 %v2233
  %v2306 = vunpack.c.h.b16 %v2233
  %v2307 = vunpack.c.l.b16 %v2234
  %v2308 = vunpack.c.l.b16 %v2235
  %v2309 = vunpack.c.h.b16 %v2235
  %v2310 = vunpack.c.l.b16 %v2236
  %v2311 = vunpack.c.l.b16 %v2237
  %v2312 = vunpack.c.h.b16 %v2237
  %v2313 = vunpack.c.l.b16 %v2238
  %v2314 = vunpack.c.l.b16 %v2239
  %v2315 = vunpack.c.h.b16 %v2239
  %v2316 = vunpack.c.l.b16 %v2240
  %v2317 = vunpack.c.l.b16 %v2241
  %v2318 = vunpack.c.h.b16 %v2241
  %v2319 = vunpack.c.l.b16 %v2242
  %v2320 = vunpack.c.l.b16 %v2243
  %v2321 = vunpack.c.h.b16 %v2243
  %v2322 = vunpack.c.l.b16 %v2244
  %v2323 = vunpack.c.l.b16 %v2245
  %v2324 = vunpack.c.h.b16 %v2245
  %v2325 = vunpack.c.l.b16 %v2246
  %v2326 = vunpack.c.l.b16 %v2247
  %v2327 = vunpack.c.h.b16 %v2247
  %v2328 = vunpack.c.l.b16 %v2248
  %v2329 = vpack.c.b16 %v2284, %v2281
  %v2330 = vpack.c.b16 %v2285, %v2282
  %v2331 = vpack.c.b16 %v2286, %v2283
  %v2332 = vpack.c.b16 %v2290, %v2287
  %v2333 = vpack.c.b16 %v2291, %v2288
  %v2334 = vpack.c.b16 %v2292, %v2289
  %v2335 = vpack.c.b16 %v2296, %v2293
  %v2336 = vpack.c.b16 %v2297, %v2294
  %v2337 = vpack.c.b16 %v2298, %v2295
  %v2338 = vpack.c.b16 %v2302, %v2299
  %v2339 = vpack.c.b16 %v2303, %v2300
  %v2340 = vpack.c.b16 %v2304, %v2301
  %v2341 = vpack.c.b16 %v2308, %v2305
  %v2342 = vpack.c.b16 %v2309, %v2306
  %v2343 = vpack.c.b16 %v2310, %v2307
  %v2344 = vpack.c.b16 %v2314, %v2311
  %v2345 = vpack.c.b16 %v2315, %v2312
  %v2346 = vpack.c.b16 %v2316, %v2313
  %v2347 = vpack.c.b16 %v2320, %v2317
  %v2348 = vpack.c.b16 %v2321, %v2318
  %v2349 = vpack.c.b16 %v2322, %v2319
  %v2350 = vpack.c.b16 %v2326, %v2323
  %v2351 = vpack.c.b16 %v2327, %v2324
  %v2352 = vpack.c.b16 %v2328, %v2325
  %2377 = vmatprep.subr.bf16.mxu0 %v2330
  %2378 = vmatpush1.bf16.msra.mxu0 %v2329
  %2379 = vmatprep.subr.bf16.mxu0 %v2333
  %2380 = vmatpush1.bf16.msra.mxu0 %v2332
  %2381 = vmatprep.subr.bf16.mxu0 %v2336
  %2382 = vmatpush1.bf16.msra.mxu0 %v2335
  %2383 = vmatprep.subr.bf16.mxu0 %v2339
  %2384 = vmatpush1.bf16.msra.mxu0 %v2338
  %2385 = vmatprep.subr.bf16.mxu0 %v2342
  %2386 = vmatpush1.bf16.msra.mxu0 %v2341
  %2387 = vmatprep.subr.bf16.mxu0 %v2345
  %2388 = vmatpush1.bf16.msra.mxu0 %v2344
  %2389 = vmatprep.subr.bf16.mxu0 %v2348
  %2390 = vmatpush1.bf16.msra.mxu0 %v2347
  %2391 = vmatprep.subr.bf16.mxu0 %v2351
  %2392 = vmatpush1.bf16.msra.mxu0 %v2350
  %2393 = vmatprep.subr.bf16.mxu0 0
  %2394 = vmatpush1.bf16.msra.mxu0 0
  %2395 = vmatprep.subr.bf16.mxu0 0
  %2396 = vmatpush1.bf16.msra.mxu0 0
  %2397 = vmatprep.subr.bf16.mxu0 0
  %2398 = vmatpush1.bf16.msra.mxu0 0
  %2399 = vmatprep.subr.bf16.mxu0 0
  %2400 = vmatpush1.bf16.msra.mxu0 0
  %2401 = vmatprep.subr.bf16.mxu0 0
  %2402 = vmatpush1.bf16.msra.mxu0 0
  %2403 = vmatprep.subr.bf16.mxu0 0
  %2404 = vmatpush1.bf16.msra.mxu0 0
  %2405 = vmatprep.subr.bf16.mxu0 0
  %2406 = vmatpush1.bf16.msra.mxu0 0
  %2407 = vmatprep.subr.bf16.mxu0 0
  %2408 = vmatpush1.bf16.msra.mxu0 0
  %2409 = vmatprep.mubr.bf16.mxu0 0
  %2410 = vmatmul.mubr.bf16.gmra.mrb[0].mxu0 %v2195
  %v2411 = vpop.f32.mrb[0].mxu0
  %v2412 = vadd.f32 0.0, %v2411
  %v2413 = vpop.f32.mrb[0].mxu0
  %v2414 = vadd.f32 0.0, %v2413
  %v2415 = vpop.f32.mrb[0].mxu0
  %v2416 = vadd.f32 0.0, %v2415
  %v2417 = vpop.f32.mrb[0].mxu0
  %v2418 = vadd.f32 0.0, %v2417
  %2419 = vdwg.mxu0
  %2420 = vmatprep.subr.bf16.mxu0 0
  %2421 = vmatpush1.bf16.msra.mxu0 %v2331
  %2422 = vmatprep.subr.bf16.mxu0 0
  %2423 = vmatpush1.bf16.msra.mxu0 %v2334
  %2424 = vmatprep.subr.bf16.mxu0 0
  %2425 = vmatpush1.bf16.msra.mxu0 %v2337
  %2426 = vmatprep.subr.bf16.mxu0 0
  %2427 = vmatpush1.bf16.msra.mxu0 %v2340
  %2428 = vmatprep.subr.bf16.mxu0 0
  %2429 = vmatpush1.bf16.msra.mxu0 %v2343
  %2430 = vmatprep.subr.bf16.mxu0 0
  %2431 = vmatpush1.bf16.msra.mxu0 %v2346
  %2432 = vmatprep.subr.bf16.mxu0 0
  %2433 = vmatpush1.bf16.msra.mxu0 %v2349
  %2434 = vmatprep.subr.bf16.mxu0 0
  %2435 = vmatpush1.bf16.msra.mxu0 %v2352
  %2436 = vmatprep.subr.bf16.mxu0 0
  %2437 = vmatpush1.bf16.msra.mxu0 0
  %2438 = vmatprep.subr.bf16.mxu0 0
  %2439 = vmatpush1.bf16.msra.mxu0 0
  %2440 = vmatprep.subr.bf16.mxu0 0
  %2441 = vmatpush1.bf16.msra.mxu0 0
  %2442 = vmatprep.subr.bf16.mxu0 0
  %2443 = vmatpush1.bf16.msra.mxu0 0
  %2444 = vmatprep.subr.bf16.mxu0 0
  %2445 = vmatpush1.bf16.msra.mxu0 0
  %2446 = vmatprep.subr.bf16.mxu0 0
  %2447 = vmatpush1.bf16.msra.mxu0 0
  %2448 = vmatprep.subr.bf16.mxu0 0
  %2449 = vmatpush1.bf16.msra.mxu0 0
  %2450 = vmatprep.subr.bf16.mxu0 0
  %2451 = vmatpush1.bf16.msra.mxu0 0
  %2452 = vmatprep.mubr.bf16.mxu0 0
  %2453 = vmatmul.mubr.bf16.gmra.mrb[0].mxu0 %v2195
  %v2454 = vpop.f32.mrb[0].mxu0
  %v2455 = vadd.f32 0.0, %v2454
  %v2456 = vpop.f32.mrb[0].mxu0
  %v2457 = vpop.f32.mrb[0].mxu0
  %v2458 = vadd.f32 0.0, %v2457
  %v2459 = vpop.f32.mrb[0].mxu0
  %2460 = vdwg.mxu0
  %v2461 = vadd.f32 %v2211, %v2412
  %v2462 = vadd.f32 %v2214, %v2416
  %v2463 = vxor.u32 %v2461, 2147483648
  %v2464 = vxor.u32 %v2462, 2147483648
  %v2465 = vmul.f32 %v2463, 1.442695
  %v2466 = vpow.pop %v2465
  %v2467 = vmul.f32 %v2464, 1.442695
  %v2468 = vpow.pop %v2467
  %v2469 = vadd.f32 %v2466, 1.0
  %v2470 = vadd.f32 %v2468, 1.0
  %v2471 = vrcp.pop %v2469
  %v2472 = vmul.f32 1.0, %v2471
  %v2473 = vrcp.pop %v2470
  %v2474 = vmul.f32 1.0, %v2473
  %v2475 = vadd.f32 %v2212, %v2414
  %v2476 = vadd.f32 %v2215, %v2418
  %v2477 = vxor.u32 %v2475, 2147483648
  %v2478 = vxor.u32 %v2476, 2147483648
  %v2479 = vmul.f32 %v2477, 1.442695
  %v2480 = vpow.pop %v2479
  %v2481 = vmul.f32 %v2478, 1.442695
  %v2482 = vpow.pop %v2481
  %v2483 = vadd.f32 %v2480, 1.0
  %v2484 = vadd.f32 %v2482, 1.0
  %v2485 = vrcp.pop %v2483
  %v2486 = vmul.f32 1.0, %v2485
  %v2487 = vrcp.pop %v2484
  %v2488 = vmul.f32 1.0, %v2487
  %v2489 = vadd.f32 %v2455, %v33
  %v2490 = vadd.f32 %v2458, %v33
  %v2491 = vmul.f32 %v2472, %v2489
  %v2492 = vmul.f32 %v2474, %v2490
  %v2493 = vadd.f32 %v2213, %v2491
  %v2494 = vadd.f32 %v2216, %v2492
  %v2495 = vtanh.pop %v2493
  %v2496 = vtanh.pop %v2494
  %v2497 = vsub.f32 1.0, %v2486
  %v2498 = vsub.f32 1.0, %v2488
  %v2499 = vmul.f32 %v2497, %v2495
  %v2500 = vmul.f32 %v2498, %v2496
  %v2501 = vmul.f32 %v2486, %v2193
  %v2502 = vmul.f32 %v2488, %v2194
  %v2503 = vadd.f32 %v2499, %v2501
  %v2504 = vadd.f32 %v2500, %v2502
  %v2505 = vpack.c.bf16 %v2504, %v2503
  %v2507 = vunpack.c.l.b16 %v2505
  %v2508 = vunpack.c.h.b16 %v2505
  %v2509 = vpack.c.b16 %v2507, %v2507
  %v2510 = vpack.c.b16 %v2508, %v2508
  %s2513 = scalar_lea.vmem %s4, 56
  %2514 = vst [vmem:[%s2513] sm:$0xf] %v2509
  %2515 = vst [vmem:[%s2513 + $0x4] sm:$0xf] %v2510
  %2516 = vst [vmem:[#allocation2] sm:$0xff] %v2503
  %2517 = vst [vmem:[#allocation2 + $0x8] sm:$0xff] %v2504
  // Predicated region
  $region22: #{recurrent_network_forward.1} parent=0 // pred_check
    %p2518 = pneg %p20
  $region23: #{recurrent_network_forward.1} parent=0 // pred_check_branch
    %2520 = sbr.rel (%p2518) target = $region25
  $region24: #{recurrent_network_forward.1} parent=0 // pred_region
    %2521 = vst [vmem:[%s5] sm:$0xff] %v2503
    %2522 = vst [vmem:[%s5 + $0x8] sm:$0xff] %v2504
  $region25: #{recurrent_network_forward.1} parent=0 // pred_fallthru
    _
  // Predicated region
  $region26: #{recurrent_network_forward.1} parent=0 // pred_check
    _
  $region27: #{recurrent_network_forward.1} parent=0 // pred_check_branch
    %2524 = sbr.rel (0) target = $region29
  $region28: #{recurrent_network_forward.1} parent=0 // pred_region
    _
  $region29: #{recurrent_network_forward.1} parent=0 // pred_fallthru
    _
  // Predicated region
  $region30: #{recurrent_network_forward.1} parent=0 // pred_check
    _
  $region31: #{recurrent_network_forward.1} parent=0 // pred_check_branch
    %2526 = sbr.rel (0) target = $region33
  $region32: #{recurrent_network_forward.1} parent=0 // pred_region
    _
  $region33: #{recurrent_network_forward.1} parent=0 // pred_fallthru
    _
  // Predicated region
  $region34: #{recurrent_network_forward.1} parent=0 // pred_check
    _
  $region35: #{recurrent_network_forward.1} parent=0 // pred_check_branch
    %2528 = sbr.rel (0) target = $region37
  $region36: #{recurrent_network_forward.1} parent=0 // pred_region
    _
  $region37: #{recurrent_network_forward.1} parent=0 // pred_fallthru
    _
  // Predicated region
  $region38: #{recurrent_network_forward.1} parent=0 // pred_check
    _
  $region39: #{recurrent_network_forward.1} parent=0 // pred_check_branch
    %2530 = sbr.rel (0) target = $region41
  $region40: #{recurrent_network_forward.1} parent=0 // pred_region
    _
  $region41: #{recurrent_network_forward.1} parent=0 // pred_fallthru
    _

</llo_original>
